<compile_context>
chip_gen: v5e
topology: v5e:2x2
jax: 0.10.0
libtpu: 0.0.40
codegen_flags: <defaults>
</compile_context>

<pallas_src>
import functools
import math

import jax
import jax.numpy as jnp
import numpy as np
from jax import lax
from jax.experimental import pallas as pl
from jax.experimental.pallas import tpu as pltpu


# ----------------------------------------------------------------------------
# Fused AttentionalPropagation kernel
# ----------------------------------------------------------------------------

def _attn_prop_kernel(x_ref, src_ref,
                      wq_ref, bq_ref, wkv_ref, bkv_ref,
                      wm_ref, bm_ref,
                      w1x_ref, w1m_ref, s1_ref,
                      w2_ref, s2_ref,
                      o_ref, *, num_heads, head_dim):
    """x_ref: (1,N,C), src_ref: (1,M,C).  Computes x + MLP([x, attn_message])."""
    C = num_heads * head_dim
    x = x_ref[0]                                   # (N, C) f32
    src = src_ref[0]                               # (M, C) f32
    xb = x.astype(jnp.bfloat16)
    sb = src.astype(jnp.bfloat16)

    # 1x1-conv projections (weights pre-transposed to (Cin, Cout), bf16).
    q = jnp.dot(xb, wq_ref[...], preferred_element_type=jnp.float32) + bq_ref[...]
    kv = jnp.dot(sb, wkv_ref[...], preferred_element_type=jnp.float32) + bkv_ref[...]
    qb = q.astype(jnp.bfloat16)                    # (N, C)
    kvb = kv.astype(jnp.bfloat16)                  # (M, 2C): [k | v]

    wm = wm_ref[...]                               # (C, C) bf16, head-contig rows
    scale = 1.0 / math.sqrt(head_dim)

    # Per-head attention; merge conv applied per head and accumulated so the
    # output stays a single lane-dense (N, C) value (no concat relayout).
    message = bm_ref[...]                          # (1, C), broadcasts
    for h in range(num_heads):
        lo = h * head_dim
        hi = lo + head_dim
        qh = qb[:, lo:hi]                          # (N, D)
        kh = kvb[:, lo:hi]                         # (M, D)
        vh = kvb[:, C + lo:C + hi]                 # (M, D)
        s = lax.dot_general(qh, kh, (((1,), (1,)), ((), ())),
                            preferred_element_type=jnp.float32) * scale   # (N, M)
        s = s - jnp.max(s, axis=-1, keepdims=True)
        p = jnp.exp(s)
        p = p * pl.reciprocal(jnp.sum(p, axis=-1, keepdims=True), approx=True)
        oh = jnp.dot(p.astype(jnp.bfloat16), vh,
                     preferred_element_type=jnp.float32)                  # (N, D)
        message = message + jnp.dot(oh.astype(jnp.bfloat16), wm[lo:hi, :],
                                    preferred_element_type=jnp.float32)   # (N, C)

    # MLP([2C, 2C, C]) on concat([x, message]) with BN folded into w1/s1.
    h1 = (jnp.dot(xb, w1x_ref[...], preferred_element_type=jnp.float32)
          + jnp.dot(message.astype(jnp.bfloat16), w1m_ref[...],
                    preferred_element_type=jnp.float32)
          + s1_ref[...])
    h1 = jnp.maximum(h1, 0.0)
    delta = jnp.dot(h1.astype(jnp.bfloat16), w2_ref[...],
                    preferred_element_type=jnp.float32) + s2_ref[...]

    o_ref[0] = (x + delta).astype(o_ref.dtype)     # residual, lane-dense store


def attentional_propagation(params, x, source, num_heads):
    """x: (B, N, C), source: (B, M, C) -> (B, N, C) = x + delta."""
    B, N, C = x.shape
    M = source.shape[1]
    D = C // num_heads
    kernel = functools.partial(_attn_prop_kernel, num_heads=num_heads, head_dim=D)
    const = lambda b: (0, 0)
    return pl.pallas_call(
        kernel,
        out_shape=jax.ShapeDtypeStruct((B, N, C), jnp.float32),
        grid=(B,),
        in_specs=[
            pl.BlockSpec((1, N, C), lambda b: (b, 0, 0)),      # x
            pl.BlockSpec((1, M, C), lambda b: (b, 0, 0)),      # source
            pl.BlockSpec((C, C), const),                       # wq
            pl.BlockSpec((1, C), const),                       # bq
            pl.BlockSpec((C, 2 * C), const),                   # wkv
            pl.BlockSpec((1, 2 * C), const),                   # bkv
            pl.BlockSpec((C, C), const),                       # wmerge
            pl.BlockSpec((1, C), const),                       # bmerge
            pl.BlockSpec((C, 2 * C), const),                   # w1 (x half)
            pl.BlockSpec((C, 2 * C), const),                   # w1 (message half)
            pl.BlockSpec((1, 2 * C), const),                   # shift1 (bias*BN)
            pl.BlockSpec((2 * C, C), const),                   # w2
            pl.BlockSpec((1, C), const),                       # shift2
        ],
        out_specs=pl.BlockSpec((1, N, C), lambda b: (b, 0, 0)),
        compiler_params=pltpu.CompilerParams(dimension_semantics=("parallel",)),
    )(x, source,
      params["wq"], params["bq"], params["wkv"], params["bkv"],
      params["wm"], params["bm"],
      params["w1x"], params["w1m"], params["s1"],
      params["w2"], params["s2"])


# ----------------------------------------------------------------------------
# Parameter construction (mirrors the PyTorch module's structure/init)
# ----------------------------------------------------------------------------

def _conv_init(key, cin, cout):
    """nn.Conv1d(cin, cout, 1) style init: uniform(+-1/sqrt(cin))."""
    k1, k2 = jax.random.split(key)
    bound = 1.0 / math.sqrt(cin)
    w = jax.random.uniform(k1, (cout, cin), jnp.float32, -bound, bound)
    b = jax.random.uniform(k2, (cout,), jnp.float32, -bound, bound)
    return w, b


def _init_propagation(key, C, H):
    """One AttentionalPropagation layer; weights pre-transposed / folded / bf16."""
    D = C // H
    km, k1, k2 = jax.random.split(key, 3)

    # merge conv; q/k/v projections are deepcopies of merge (as in PyTorch).
    wm_pt, bm_pt = _conv_init(km, C, C)            # (Cout, Cin)
    wT = wm_pt.T                                   # (Cin, Cout) pre-transposed

    # PyTorch `view(B, D, H, N)` maps proj output channel c -> (d=c//H, h=c%H);
    # the kernel uses head-contiguous channels j = h*D + d.  Permute the proj
    # output columns (and the merge input rows) so the math matches exactly.
    j = jnp.arange(C)
    perm = (j % D) * H + (j // D)

    wq = wT[:, perm]
    bq = bm_pt[perm]
    wkv = jnp.concatenate([wT[:, perm], wT[:, perm]], axis=1)   # k, v share init
    bkv = jnp.concatenate([bq, bq])
    wmerge = wT[perm, :]
    bmerge = bm_pt

    # MLP([2C, 2C, C]): Conv(2C->2C,bias) + BN(2C) + ReLU, Conv(2C->C,bias=0).
    w1_pt, b1 = _conv_init(k1, 2 * C, 2 * C)
    w2_pt, b2 = _conv_init(k2, 2 * C, C)
    b2 = jnp.zeros_like(b2)                        # nn.init.constant_(mlp[-1].bias, 0)
    eps = 1e-5
    bn_scale = 1.0 / math.sqrt(1.0 + eps)          # eval-mode BN, default stats
    w1 = w1_pt.T * bn_scale                        # (2C_in, 2C_out), BN folded
    s1 = (b1 * bn_scale).reshape(1, 2 * C)
    w2 = w2_pt.T

    bf = lambda a: a.astype(jnp.bfloat16)
    return dict(
        wq=bf(wq), bq=bq.reshape(1, C),
        wkv=bf(wkv), bkv=bkv.reshape(1, 2 * C),
        wm=bf(wmerge), bm=bmerge.reshape(1, C),
        w1x=bf(w1[:C, :]), w1m=bf(w1[C:, :]), s1=s1,
        w2=bf(w2), s2=b2.reshape(1, C),
    )


class AttentionalGNNJAX:
    """AttentionalGNN(feature_dim, layer_names) with channels-last descriptors."""

    def __init__(self, feature_dim, layer_names, key, num_heads=4):
        assert feature_dim % num_heads == 0
        self.num_heads = num_heads
        self.names = list(layer_names)
        keys = jax.random.split(key, max(len(self.names), 1))
        self.layers = [_init_propagation(k, feature_dim, num_heads) for k in keys]

    def __call__(self, desc0, desc1):
        for p, name in zip(self.layers, self.names):
            src0, src1 = (desc1, desc0) if name == "cross" else (desc0, desc1)
            new0 = attentional_propagation(p, desc0, src0, self.num_heads)
            new1 = attentional_propagation(p, desc1, src1, self.num_heads)
            desc0, desc1 = new0, new1
        return desc0, desc1


# ----------------------------------------------------------------------------
# Pure-JAX reference (same bf16 casts) for a correctness check
# ----------------------------------------------------------------------------

def _reference_propagation(p, x, source, H):
    B, N, C = x.shape
    D = C // H
    xb = x.astype(jnp.bfloat16)
    sb = source.astype(jnp.bfloat16)
    q = jnp.dot(xb, p["wq"], preferred_element_type=jnp.float32) + p["bq"]
    kv = jnp.dot(sb, p["wkv"], preferred_element_type=jnp.float32) + p["bkv"]
    k, v = kv[..., :C], kv[..., C:]

    def split(t):
        b, L, _ = t.shape
        return t.reshape(b, L, H, D).transpose(0, 2, 1, 3)     # (B, H, L, D)

    qh, kh, vh = split(q), split(k), split(v)
    s = jnp.einsum("bhnd,bhmd->bhnm",
                   qh.astype(jnp.bfloat16), kh.astype(jnp.bfloat16),
                   preferred_element_type=jnp.float32) / math.sqrt(D)
    prob = jax.nn.softmax(s, axis=-1)
    o = jnp.einsum("bhnm,bhmd->bhnd",
                   prob.astype(jnp.bfloat16), vh.astype(jnp.bfloat16),
                   preferred_element_type=jnp.float32)
    o = o.transpose(0, 2, 1, 3).reshape(B, N, C)               # head-contiguous
    msg = jnp.dot(o.astype(jnp.bfloat16), p["wm"],
                  preferred_element_type=jnp.float32) + p["bm"]
    h1 = (jnp.dot(xb, p["w1x"], preferred_element_type=jnp.float32)
          + jnp.dot(msg.astype(jnp.bfloat16), p["w1m"],
                    preferred_element_type=jnp.float32)
          + p["s1"])
    h1 = jnp.maximum(h1, 0.0)
    delta = jnp.dot(h1.astype(jnp.bfloat16), p["w2"],
                    preferred_element_type=jnp.float32) + p["s2"]
    return x + delta


def _reference_gnn(model, desc0, desc1):
    for p, name in zip(model.layers, model.names):
        src0, src1 = (desc1, desc0) if name == "cross" else (desc0, desc1)
        n0 = _reference_propagation(p, desc0, src0, model.num_heads)
        n1 = _reference_propagation(p, desc1, src1, model.num_heads)
        desc0, desc1 = n0, n1
    return desc0, desc1


# ----------------------------------------------------------------------------
# Main
# ----------------------------------------------------------------------------

if __name__ == "__main__":
    feature_dim, num_heads = 64, 4
    layer_names = ["self", "cross"]
    model = AttentionalGNNJAX(feature_dim, layer_names,
                              jax.random.PRNGKey(0), num_heads=num_heads)

    B, N0, N1 = 2, 16, 12
    kd = jax.random.split(jax.random.PRNGKey(0), 2)
    desc0 = jax.random.normal(kd[0], (B, N0, feature_dim), jnp.float32)
    desc1 = jax.random.normal(kd[1], (B, N1, feature_dim), jnp.float32)

    out0, out1 = model(desc0, desc1)
    jax.block_until_ready((out0, out1))

    ref0, ref1 = _reference_gnn(model, desc0, desc1)
    np.testing.assert_allclose(np.asarray(out0), np.asarray(ref0),
                               rtol=5e-2, atol=5e-2)
    np.testing.assert_allclose(np.asarray(out1), np.asarray(ref1),
                               rtol=5e-2, atol=5e-2)

    print("KERNEL_OK")
</pallas_src>

<mosaic_0001>
module attributes {stable_mosaic.version = 11 : i64} {
  func.func @_attn_prop_kernel(%arg0: i32, %arg1: memref<1x16x64xf32, #tpu.memory_space<vmem>>, %arg2: memref<1x16x64xf32, #tpu.memory_space<vmem>>, %arg3: memref<64x64xbf16, #tpu.memory_space<vmem>>, %arg4: memref<1x64xf32, #tpu.memory_space<vmem>>, %arg5: memref<64x128xbf16, #tpu.memory_space<vmem>>, %arg6: memref<1x128xf32, #tpu.memory_space<vmem>>, %arg7: memref<64x64xbf16, #tpu.memory_space<vmem>>, %arg8: memref<1x64xf32, #tpu.memory_space<vmem>>, %arg9: memref<64x128xbf16, #tpu.memory_space<vmem>>, %arg10: memref<64x128xbf16, #tpu.memory_space<vmem>>, %arg11: memref<1x128xf32, #tpu.memory_space<vmem>>, %arg12: memref<128x64xbf16, #tpu.memory_space<vmem>>, %arg13: memref<1x64xf32, #tpu.memory_space<vmem>>, %arg14: memref<1x16x64xf32, #tpu.memory_space<vmem>>) attributes {dimension_semantics = [#tpu.dimension_semantics<parallel>], iteration_bounds = array<i64: 2>, scalar_prefetch = 0 : i64, scratch_operands = 0 : i64, tpu.core_type = #tpu.core_type<tc>, window_params = [{transform_indices = @transform_0, window_bounds = array<i64: 1, 16, 64>}, {transform_indices = @transform_1, window_bounds = array<i64: 1, 16, 64>}, {pipeline_mode = #tpu.pipeline_mode<synchronous>, transform_indices = @transform_2, window_bounds = array<i64: 64, 64>}, {pipeline_mode = #tpu.pipeline_mode<synchronous>, transform_indices = @transform_3, window_bounds = array<i64: 1, 64>}, {pipeline_mode = #tpu.pipeline_mode<synchronous>, transform_indices = @transform_4, window_bounds = array<i64: 64, 128>}, {pipeline_mode = #tpu.pipeline_mode<synchronous>, transform_indices = @transform_5, window_bounds = array<i64: 1, 128>}, {pipeline_mode = #tpu.pipeline_mode<synchronous>, transform_indices = @transform_6, window_bounds = array<i64: 64, 64>}, {pipeline_mode = #tpu.pipeline_mode<synchronous>, transform_indices = @transform_7, window_bounds = array<i64: 1, 64>}, {pipeline_mode = #tpu.pipeline_mode<synchronous>, transform_indices = @transform_8, window_bounds = array<i64: 64, 128>}, {pipeline_mode = #tpu.pipeline_mode<synchronous>, transform_indices = @transform_9, window_bounds = array<i64: 64, 128>}, {pipeline_mode = #tpu.pipeline_mode<synchronous>, transform_indices = @transform_10, window_bounds = array<i64: 1, 128>}, {pipeline_mode = #tpu.pipeline_mode<synchronous>, transform_indices = @transform_11, window_bounds = array<i64: 128, 64>}, {pipeline_mode = #tpu.pipeline_mode<synchronous>, transform_indices = @transform_12, window_bounds = array<i64: 1, 64>}, {transform_indices = @transform_13, window_bounds = array<i64: 1, 16, 64>}]} {
    %c0 = arith.constant 0 : index
    %c0_0 = arith.constant 0 : index
    %c0_1 = arith.constant 0 : index
    %0 = vector.load %arg1[%c0, %c0_0, %c0_1] : memref<1x16x64xf32, #tpu.memory_space<vmem>>, vector<1x16x64xf32>
    %1 = vector.shape_cast %0 : vector<1x16x64xf32> to vector<16x64xf32>
    %c0_2 = arith.constant 0 : index
    %c0_3 = arith.constant 0 : index
    %c0_4 = arith.constant 0 : index
    %2 = vector.load %arg2[%c0_2, %c0_3, %c0_4] : memref<1x16x64xf32, #tpu.memory_space<vmem>>, vector<1x16x64xf32>
    %3 = vector.shape_cast %2 : vector<1x16x64xf32> to vector<16x64xf32>
    %4 = arith.truncf %1 : vector<16x64xf32> to vector<16x64xbf16>
    %5 = arith.truncf %3 : vector<16x64xf32> to vector<16x64xbf16>
    %c0_5 = arith.constant 0 : index
    %c0_6 = arith.constant 0 : index
    %6 = vector.load %arg3[%c0_5, %c0_6] : memref<64x64xbf16, #tpu.memory_space<vmem>>, vector<64x64xbf16>
    %cst = arith.constant dense<0.000000e+00> : vector<16x64xf32>
    %7 = tpu.matmul %4, %6, %cst {dimension_numbers = #tpu.dot_dimension_numbers<[1], [0], [0], [1], [0, 0, 1, 1], [], []>} : vector<16x64xbf16>, vector<64x64xbf16>, vector<16x64xf32> -> vector<16x64xf32>
    %c0_7 = arith.constant 0 : index
    %c0_8 = arith.constant 0 : index
    %8 = vector.load %arg4[%c0_7, %c0_8] : memref<1x64xf32, #tpu.memory_space<vmem>>, vector<1x64xf32>
    %9 = vector.broadcast %8 : vector<1x64xf32> to vector<16x64xf32>
    %10 = arith.addf %7, %9 : vector<16x64xf32>
    %c0_9 = arith.constant 0 : index
    %c0_10 = arith.constant 0 : index
    %11 = vector.load %arg5[%c0_9, %c0_10] : memref<64x128xbf16, #tpu.memory_space<vmem>>, vector<64x128xbf16>
    %cst_11 = arith.constant dense<0.000000e+00> : vector<16x128xf32>
    %12 = tpu.matmul %5, %11, %cst_11 {dimension_numbers = #tpu.dot_dimension_numbers<[1], [0], [0], [1], [0, 0, 1, 1], [], []>} : vector<16x64xbf16>, vector<64x128xbf16>, vector<16x128xf32> -> vector<16x128xf32>
    %c0_12 = arith.constant 0 : index
    %c0_13 = arith.constant 0 : index
    %13 = vector.load %arg6[%c0_12, %c0_13] : memref<1x128xf32, #tpu.memory_space<vmem>>, vector<1x128xf32>
    %14 = vector.broadcast %13 : vector<1x128xf32> to vector<16x128xf32>
    %15 = arith.addf %12, %14 : vector<16x128xf32>
    %16 = arith.truncf %10 : vector<16x64xf32> to vector<16x64xbf16>
    %17 = arith.truncf %15 : vector<16x128xf32> to vector<16x128xbf16>
    %c0_14 = arith.constant 0 : index
    %c0_15 = arith.constant 0 : index
    %18 = vector.load %arg7[%c0_14, %c0_15] : memref<64x64xbf16, #tpu.memory_space<vmem>>, vector<64x64xbf16>
    %c0_16 = arith.constant 0 : index
    %c0_17 = arith.constant 0 : index
    %19 = vector.load %arg8[%c0_16, %c0_17] : memref<1x64xf32, #tpu.memory_space<vmem>>, vector<1x64xf32>
    %20 = vector.extract_strided_slice %16 {offsets = [0, 0], sizes = [16, 16], strides = [1, 1]} : vector<16x64xbf16> to vector<16x16xbf16>
    %21 = vector.extract_strided_slice %17 {offsets = [0, 0], sizes = [16, 16], strides = [1, 1]} : vector<16x128xbf16> to vector<16x16xbf16>
    %22 = vector.extract_strided_slice %17 {offsets = [0, 64], sizes = [16, 16], strides = [1, 1]} : vector<16x128xbf16> to vector<16x16xbf16>
    %cst_18 = arith.constant dense<0.000000e+00> : vector<16x16xf32>
    %23 = tpu.matmul %20, %21, %cst_18 {dimension_numbers = #tpu.dot_dimension_numbers<[1], [1], [0], [0], [0, 0, 1, 0], [], []>} : vector<16x16xbf16>, vector<16x16xbf16>, vector<16x16xf32> -> vector<16x16xf32>
    %cst_19 = arith.constant 2.500000e-01 : f32
    %24 = vector.broadcast %cst_19 : f32 to vector<16x16xf32>
    %25 = arith.mulf %23, %24 : vector<16x16xf32>
    %cst_20 = arith.constant dense<0xFF800000> : vector<16xf32>
    %26 = vector.multi_reduction <maximumf>, %25, %cst_20 [1] : vector<16x16xf32> to vector<16xf32>
    %27 = vector.shape_cast %26 : vector<16xf32> to vector<16x1xf32>
    %28 = vector.broadcast %27 : vector<16x1xf32> to vector<16x16xf32>
    %29 = arith.subf %25, %28 : vector<16x16xf32>
    %30 = math.exp %29 : vector<16x16xf32>
    %cst_21 = arith.constant dense<0.000000e+00> : vector<16xf32>
    %31 = vector.multi_reduction <add>, %30, %cst_21 [1] : vector<16x16xf32> to vector<16xf32>
    %32 = vector.shape_cast %31 : vector<16xf32> to vector<16x1xf32>
    %33 = tpu.reciprocal %32 {approx = true} : vector<16x1xf32> -> vector<16x1xf32>
    %34 = vector.broadcast %33 : vector<16x1xf32> to vector<16x16xf32>
    %35 = arith.mulf %30, %34 : vector<16x16xf32>
    %36 = arith.truncf %35 : vector<16x16xf32> to vector<16x16xbf16>
    %cst_22 = arith.constant dense<0.000000e+00> : vector<16x16xf32>
    %37 = tpu.matmul %36, %22, %cst_22 {dimension_numbers = #tpu.dot_dimension_numbers<[1], [0], [0], [1], [0, 0, 1, 1], [], []>} : vector<16x16xbf16>, vector<16x16xbf16>, vector<16x16xf32> -> vector<16x16xf32>
    %38 = arith.truncf %37 : vector<16x16xf32> to vector<16x16xbf16>
    %39 = vector.extract_strided_slice %18 {offsets = [0, 0], sizes = [16, 64], strides = [1, 1]} : vector<64x64xbf16> to vector<16x64xbf16>
    %cst_23 = arith.constant dense<0.000000e+00> : vector<16x64xf32>
    %40 = tpu.matmul %38, %39, %cst_23 {dimension_numbers = #tpu.dot_dimension_numbers<[1], [0], [0], [1], [0, 0, 1, 1], [], []>} : vector<16x16xbf16>, vector<16x64xbf16>, vector<16x64xf32> -> vector<16x64xf32>
    %41 = vector.broadcast %19 : vector<1x64xf32> to vector<16x64xf32>
    %42 = arith.addf %41, %40 : vector<16x64xf32>
    %43 = vector.extract_strided_slice %16 {offsets = [0, 16], sizes = [16, 16], strides = [1, 1]} : vector<16x64xbf16> to vector<16x16xbf16>
    %44 = vector.extract_strided_slice %17 {offsets = [0, 16], sizes = [16, 16], strides = [1, 1]} : vector<16x128xbf16> to vector<16x16xbf16>
    %45 = vector.extract_strided_slice %17 {offsets = [0, 80], sizes = [16, 16], strides = [1, 1]} : vector<16x128xbf16> to vector<16x16xbf16>
    %cst_24 = arith.constant dense<0.000000e+00> : vector<16x16xf32>
    %46 = tpu.matmul %43, %44, %cst_24 {dimension_numbers = #tpu.dot_dimension_numbers<[1], [1], [0], [0], [0, 0, 1, 0], [], []>} : vector<16x16xbf16>, vector<16x16xbf16>, vector<16x16xf32> -> vector<16x16xf32>
    %cst_25 = arith.constant 2.500000e-01 : f32
    %47 = vector.broadcast %cst_25 : f32 to vector<16x16xf32>
    %48 = arith.mulf %46, %47 : vector<16x16xf32>
    %cst_26 = arith.constant dense<0xFF800000> : vector<16xf32>
    %49 = vector.multi_reduction <maximumf>, %48, %cst_26 [1] : vector<16x16xf32> to vector<16xf32>
    %50 = vector.shape_cast %49 : vector<16xf32> to vector<16x1xf32>
    %51 = vector.broadcast %50 : vector<16x1xf32> to vector<16x16xf32>
    %52 = arith.subf %48, %51 : vector<16x16xf32>
    %53 = math.exp %52 : vector<16x16xf32>
    %cst_27 = arith.constant dense<0.000000e+00> : vector<16xf32>
    %54 = vector.multi_reduction <add>, %53, %cst_27 [1] : vector<16x16xf32> to vector<16xf32>
    %55 = vector.shape_cast %54 : vector<16xf32> to vector<16x1xf32>
    %56 = tpu.reciprocal %55 {approx = true} : vector<16x1xf32> -> vector<16x1xf32>
    %57 = vector.broadcast %56 : vector<16x1xf32> to vector<16x16xf32>
    %58 = arith.mulf %53, %57 : vector<16x16xf32>
    %59 = arith.truncf %58 : vector<16x16xf32> to vector<16x16xbf16>
    %cst_28 = arith.constant dense<0.000000e+00> : vector<16x16xf32>
    %60 = tpu.matmul %59, %45, %cst_28 {dimension_numbers = #tpu.dot_dimension_numbers<[1], [0], [0], [1], [0, 0, 1, 1], [], []>} : vector<16x16xbf16>, vector<16x16xbf16>, vector<16x16xf32> -> vector<16x16xf32>
    %61 = arith.truncf %60 : vector<16x16xf32> to vector<16x16xbf16>
    %62 = vector.extract_strided_slice %18 {offsets = [16, 0], sizes = [16, 64], strides = [1, 1]} : vector<64x64xbf16> to vector<16x64xbf16>
    %cst_29 = arith.constant dense<0.000000e+00> : vector<16x64xf32>
    %63 = tpu.matmul %61, %62, %cst_29 {dimension_numbers = #tpu.dot_dimension_numbers<[1], [0], [0], [1], [0, 0, 1, 1], [], []>} : vector<16x16xbf16>, vector<16x64xbf16>, vector<16x64xf32> -> vector<16x64xf32>
    %64 = arith.addf %42, %63 : vector<16x64xf32>
    %65 = vector.extract_strided_slice %16 {offsets = [0, 32], sizes = [16, 16], strides = [1, 1]} : vector<16x64xbf16> to vector<16x16xbf16>
    %66 = vector.extract_strided_slice %17 {offsets = [0, 32], sizes = [16, 16], strides = [1, 1]} : vector<16x128xbf16> to vector<16x16xbf16>
    %67 = vector.extract_strided_slice %17 {offsets = [0, 96], sizes = [16, 16], strides = [1, 1]} : vector<16x128xbf16> to vector<16x16xbf16>
    %cst_30 = arith.constant dense<0.000000e+00> : vector<16x16xf32>
    %68 = tpu.matmul %65, %66, %cst_30 {dimension_numbers = #tpu.dot_dimension_numbers<[1], [1], [0], [0], [0, 0, 1, 0], [], []>} : vector<16x16xbf16>, vector<16x16xbf16>, vector<16x16xf32> -> vector<16x16xf32>
    %cst_31 = arith.constant 2.500000e-01 : f32
    %69 = vector.broadcast %cst_31 : f32 to vector<16x16xf32>
    %70 = arith.mulf %68, %69 : vector<16x16xf32>
    %cst_32 = arith.constant dense<0xFF800000> : vector<16xf32>
    %71 = vector.multi_reduction <maximumf>, %70, %cst_32 [1] : vector<16x16xf32> to vector<16xf32>
    %72 = vector.shape_cast %71 : vector<16xf32> to vector<16x1xf32>
    %73 = vector.broadcast %72 : vector<16x1xf32> to vector<16x16xf32>
    %74 = arith.subf %70, %73 : vector<16x16xf32>
    %75 = math.exp %74 : vector<16x16xf32>
    %cst_33 = arith.constant dense<0.000000e+00> : vector<16xf32>
    %76 = vector.multi_reduction <add>, %75, %cst_33 [1] : vector<16x16xf32> to vector<16xf32>
    %77 = vector.shape_cast %76 : vector<16xf32> to vector<16x1xf32>
    %78 = tpu.reciprocal %77 {approx = true} : vector<16x1xf32> -> vector<16x1xf32>
    %79 = vector.broadcast %78 : vector<16x1xf32> to vector<16x16xf32>
    %80 = arith.mulf %75, %79 : vector<16x16xf32>
    %81 = arith.truncf %80 : vector<16x16xf32> to vector<16x16xbf16>
    %cst_34 = arith.constant dense<0.000000e+00> : vector<16x16xf32>
    %82 = tpu.matmul %81, %67, %cst_34 {dimension_numbers = #tpu.dot_dimension_numbers<[1], [0], [0], [1], [0, 0, 1, 1], [], []>} : vector<16x16xbf16>, vector<16x16xbf16>, vector<16x16xf32> -> vector<16x16xf32>
    %83 = arith.truncf %82 : vector<16x16xf32> to vector<16x16xbf16>
    %84 = vector.extract_strided_slice %18 {offsets = [32, 0], sizes = [16, 64], strides = [1, 1]} : vector<64x64xbf16> to vector<16x64xbf16>
    %cst_35 = arith.constant dense<0.000000e+00> : vector<16x64xf32>
    %85 = tpu.matmul %83, %84, %cst_35 {dimension_numbers = #tpu.dot_dimension_numbers<[1], [0], [0], [1], [0, 0, 1, 1], [], []>} : vector<16x16xbf16>, vector<16x64xbf16>, vector<16x64xf32> -> vector<16x64xf32>
    %86 = arith.addf %64, %85 : vector<16x64xf32>
    %87 = vector.extract_strided_slice %16 {offsets = [0, 48], sizes = [16, 16], strides = [1, 1]} : vector<16x64xbf16> to vector<16x16xbf16>
    %88 = vector.extract_strided_slice %17 {offsets = [0, 48], sizes = [16, 16], strides = [1, 1]} : vector<16x128xbf16> to vector<16x16xbf16>
    %89 = vector.extract_strided_slice %17 {offsets = [0, 112], sizes = [16, 16], strides = [1, 1]} : vector<16x128xbf16> to vector<16x16xbf16>
    %cst_36 = arith.constant dense<0.000000e+00> : vector<16x16xf32>
    %90 = tpu.matmul %87, %88, %cst_36 {dimension_numbers = #tpu.dot_dimension_numbers<[1], [1], [0], [0], [0, 0, 1, 0], [], []>} : vector<16x16xbf16>, vector<16x16xbf16>, vector<16x16xf32> -> vector<16x16xf32>
    %cst_37 = arith.constant 2.500000e-01 : f32
    %91 = vector.broadcast %cst_37 : f32 to vector<16x16xf32>
    %92 = arith.mulf %90, %91 : vector<16x16xf32>
    %cst_38 = arith.constant dense<0xFF800000> : vector<16xf32>
    %93 = vector.multi_reduction <maximumf>, %92, %cst_38 [1] : vector<16x16xf32> to vector<16xf32>
    %94 = vector.shape_cast %93 : vector<16xf32> to vector<16x1xf32>
    %95 = vector.broadcast %94 : vector<16x1xf32> to vector<16x16xf32>
    %96 = arith.subf %92, %95 : vector<16x16xf32>
    %97 = math.exp %96 : vector<16x16xf32>
    %cst_39 = arith.constant dense<0.000000e+00> : vector<16xf32>
    %98 = vector.multi_reduction <add>, %97, %cst_39 [1] : vector<16x16xf32> to vector<16xf32>
    %99 = vector.shape_cast %98 : vector<16xf32> to vector<16x1xf32>
    %100 = tpu.reciprocal %99 {approx = true} : vector<16x1xf32> -> vector<16x1xf32>
    %101 = vector.broadcast %100 : vector<16x1xf32> to vector<16x16xf32>
    %102 = arith.mulf %97, %101 : vector<16x16xf32>
    %103 = arith.truncf %102 : vector<16x16xf32> to vector<16x16xbf16>
    %cst_40 = arith.constant dense<0.000000e+00> : vector<16x16xf32>
    %104 = tpu.matmul %103, %89, %cst_40 {dimension_numbers = #tpu.dot_dimension_numbers<[1], [0], [0], [1], [0, 0, 1, 1], [], []>} : vector<16x16xbf16>, vector<16x16xbf16>, vector<16x16xf32> -> vector<16x16xf32>
    %105 = arith.truncf %104 : vector<16x16xf32> to vector<16x16xbf16>
    %106 = vector.extract_strided_slice %18 {offsets = [48, 0], sizes = [16, 64], strides = [1, 1]} : vector<64x64xbf16> to vector<16x64xbf16>
    %cst_41 = arith.constant dense<0.000000e+00> : vector<16x64xf32>
    %107 = tpu.matmul %105, %106, %cst_41 {dimension_numbers = #tpu.dot_dimension_numbers<[1], [0], [0], [1], [0, 0, 1, 1], [], []>} : vector<16x16xbf16>, vector<16x64xbf16>, vector<16x64xf32> -> vector<16x64xf32>
    %108 = arith.addf %86, %107 : vector<16x64xf32>
    %c0_42 = arith.constant 0 : index
    %c0_43 = arith.constant 0 : index
    %109 = vector.load %arg9[%c0_42, %c0_43] : memref<64x128xbf16, #tpu.memory_space<vmem>>, vector<64x128xbf16>
    %cst_44 = arith.constant dense<0.000000e+00> : vector<16x128xf32>
    %110 = tpu.matmul %4, %109, %cst_44 {dimension_numbers = #tpu.dot_dimension_numbers<[1], [0], [0], [1], [0, 0, 1, 1], [], []>} : vector<16x64xbf16>, vector<64x128xbf16>, vector<16x128xf32> -> vector<16x128xf32>
    %111 = arith.truncf %108 : vector<16x64xf32> to vector<16x64xbf16>
    %c0_45 = arith.constant 0 : index
    %c0_46 = arith.constant 0 : index
    %112 = vector.load %arg10[%c0_45, %c0_46] : memref<64x128xbf16, #tpu.memory_space<vmem>>, vector<64x128xbf16>
    %cst_47 = arith.constant dense<0.000000e+00> : vector<16x128xf32>
    %113 = tpu.matmul %111, %112, %cst_47 {dimension_numbers = #tpu.dot_dimension_numbers<[1], [0], [0], [1], [0, 0, 1, 1], [], []>} : vector<16x64xbf16>, vector<64x128xbf16>, vector<16x128xf32> -> vector<16x128xf32>
    %114 = arith.addf %110, %113 : vector<16x128xf32>
    %c0_48 = arith.constant 0 : index
    %c0_49 = arith.constant 0 : index
    %115 = vector.load %arg11[%c0_48, %c0_49] : memref<1x128xf32, #tpu.memory_space<vmem>>, vector<1x128xf32>
    %116 = vector.broadcast %115 : vector<1x128xf32> to vector<16x128xf32>
    %117 = arith.addf %114, %116 : vector<16x128xf32>
    %cst_50 = arith.constant 0.000000e+00 : f32
    %118 = vector.broadcast %cst_50 : f32 to vector<16x128xf32>
    %119 = arith.maximumf %117, %118 : vector<16x128xf32>
    %120 = arith.truncf %119 : vector<16x128xf32> to vector<16x128xbf16>
    %c0_51 = arith.constant 0 : index
    %c0_52 = arith.constant 0 : index
    %121 = vector.load %arg12[%c0_51, %c0_52] : memref<128x64xbf16, #tpu.memory_space<vmem>>, vector<128x64xbf16>
    %cst_53 = arith.constant dense<0.000000e+00> : vector<16x64xf32>
    %122 = tpu.matmul %120, %121, %cst_53 {dimension_numbers = #tpu.dot_dimension_numbers<[1], [0], [0], [1], [0, 0, 1, 1], [], []>} : vector<16x128xbf16>, vector<128x64xbf16>, vector<16x64xf32> -> vector<16x64xf32>
    %c0_54 = arith.constant 0 : index
    %c0_55 = arith.constant 0 : index
    %123 = vector.load %arg13[%c0_54, %c0_55] : memref<1x64xf32, #tpu.memory_space<vmem>>, vector<1x64xf32>
    %124 = vector.broadcast %123 : vector<1x64xf32> to vector<16x64xf32>
    %125 = arith.addf %122, %124 : vector<16x64xf32>
    %126 = arith.addf %1, %125 : vector<16x64xf32>
    %c0_56 = arith.constant 0 : index
    %c0_57 = arith.constant 0 : index
    %c0_58 = arith.constant 0 : index
    %127 = vector.load %arg14[%c0_56, %c0_57, %c0_58] : memref<1x16x64xf32, #tpu.memory_space<vmem>>, vector<1x16x64xf32>
    %128 = vector.shape_cast %127 : vector<1x16x64xf32> to vector<16x64xf32>
    %129 = vector.shape_cast %126 : vector<16x64xf32> to vector<1x16x64xf32>
    tpu.vector_store %arg14[%c0_56, %c0_57, %c0_58], %129 {strides = array<i32>} : memref<1x16x64xf32, #tpu.memory_space<vmem>>, vector<1x16x64xf32>,
    return
  }
  func.func @transform_0(%arg0: i32) -> (i32, i32, i32) {
    %c0_i32 = arith.constant 0 : i32
    %c0_i32_0 = arith.constant 0 : i32
    %c0_i32_1 = arith.constant 0 : i32
    return %arg0, %c0_i32, %c0_i32_0 : i32, i32, i32
  }
  func.func @transform_1(%arg0: i32) -> (i32, i32, i32) {
    %c0_i32 = arith.constant 0 : i32
    %c0_i32_0 = arith.constant 0 : i32
    %c0_i32_1 = arith.constant 0 : i32
    return %arg0, %c0_i32, %c0_i32_0 : i32, i32, i32
  }
  func.func @transform_2(%arg0: i32) -> (i32, i32) {
    %c0_i32 = arith.constant 0 : i32
    %c0_i32_0 = arith.constant 0 : i32
    %c0_i32_1 = arith.constant 0 : i32
    return %c0_i32, %c0_i32_0 : i32, i32
  }
  func.func @transform_3(%arg0: i32) -> (i32, i32) {
    %c0_i32 = arith.constant 0 : i32
    %c0_i32_0 = arith.constant 0 : i32
    %c0_i32_1 = arith.constant 0 : i32
    return %c0_i32, %c0_i32_0 : i32, i32
  }
  func.func @transform_4(%arg0: i32) -> (i32, i32) {
    %c0_i32 = arith.constant 0 : i32
    %c0_i32_0 = arith.constant 0 : i32
    %c0_i32_1 = arith.constant 0 : i32
    return %c0_i32, %c0_i32_0 : i32, i32
  }
  func.func @transform_5(%arg0: i32) -> (i32, i32) {
    %c0_i32 = arith.constant 0 : i32
    %c0_i32_0 = arith.constant 0 : i32
    %c0_i32_1 = arith.constant 0 : i32
    return %c0_i32, %c0_i32_0 : i32, i32
  }
  func.func @transform_6(%arg0: i32) -> (i32, i32) {
    %c0_i32 = arith.constant 0 : i32
    %c0_i32_0 = arith.constant 0 : i32
    %c0_i32_1 = arith.constant 0 : i32
    return %c0_i32, %c0_i32_0 : i32, i32
  }
  func.func @transform_7(%arg0: i32) -> (i32, i32) {
    %c0_i32 = arith.constant 0 : i32
    %c0_i32_0 = arith.constant 0 : i32
    %c0_i32_1 = arith.constant 0 : i32
    return %c0_i32, %c0_i32_0 : i32, i32
  }
  func.func @transform_8(%arg0: i32) -> (i32, i32) {
    %c0_i32 = arith.constant 0 : i32
    %c0_i32_0 = arith.constant 0 : i32
    %c0_i32_1 = arith.constant 0 : i32
    return %c0_i32, %c0_i32_0 : i32, i32
  }
  func.func @transform_9(%arg0: i32) -> (i32, i32) {
    %c0_i32 = arith.constant 0 : i32
    %c0_i32_0 = arith.constant 0 : i32
    %c0_i32_1 = arith.constant 0 : i32
    return %c0_i32, %c0_i32_0 : i32, i32
  }
  func.func @transform_10(%arg0: i32) -> (i32, i32) {
    %c0_i32 = arith.constant 0 : i32
    %c0_i32_0 = arith.constant 0 : i32
    %c0_i32_1 = arith.constant 0 : i32
    return %c0_i32, %c0_i32_0 : i32, i32
  }
  func.func @transform_11(%arg0: i32) -> (i32, i32) {
    %c0_i32 = arith.constant 0 : i32
    %c0_i32_0 = arith.constant 0 : i32
    %c0_i32_1 = arith.constant 0 : i32
    return %c0_i32, %c0_i32_0 : i32, i32
  }
  func.func @transform_12(%arg0: i32) -> (i32, i32) {
    %c0_i32 = arith.constant 0 : i32
    %c0_i32_0 = arith.constant 0 : i32
    %c0_i32_1 = arith.constant 0 : i32
    return %c0_i32, %c0_i32_0 : i32, i32
  }
  func.func @transform_13(%arg0: i32) -> (i32, i32, i32) {
    %c0_i32 = arith.constant 0 : i32
    %c0_i32_0 = arith.constant 0 : i32
    %c0_i32_1 = arith.constant 0 : i32
    return %arg0, %c0_i32, %c0_i32_0 : i32, i32, i32
  }
}

</mosaic_0001>

<llo_original>
// kernel: tpu_custom_call.1
$region0: #{tpu_custom_call.1}
  #allocation0 [shape = 'u32[]', space=smem, size = 0x4, offset = 0x4, fixed_abs, tag = 'smem constant byte address 0x4 - core index']
  #allocation1 [shape = 'u32[72,128]{1,0:T(1,128)}', space=vmem, size = 0x9000, scoped, tag = 'internal scratch']
  %s0 = inlined_call_operand.vmem [shape: f32[2,16,64], index: 0, kind: input, shape index: {}]
  %s1 = inlined_call_operand.vmem [shape: f32[2,16,64], index: 1, kind: input, shape index: {}]
  %s2 = inlined_call_operand.vmem [shape: bf16[64,64], index: 2, kind: input, shape index: {}]
  %s3 = inlined_call_operand.vmem [shape: f32[1,64], index: 3, kind: input, shape index: {}]
  %s4 = inlined_call_operand.hbm [shape: bf16[64,128], index: 4, kind: input, shape index: {}]
  %s5 = inlined_call_operand.vmem [shape: f32[1,128], index: 5, kind: input, shape index: {}]
  %s6 = inlined_call_operand.hbm [shape: bf16[64,64], index: 6, kind: input, shape index: {}]
  %s7 = inlined_call_operand.vmem [shape: f32[1,64], index: 7, kind: input, shape index: {}]
  %s8 = inlined_call_operand.hbm [shape: bf16[64,128], index: 8, kind: input, shape index: {}]
  %s9 = inlined_call_operand.hbm [shape: bf16[64,128], index: 9, kind: input, shape index: {}]
  %s10 = inlined_call_operand.vmem [shape: f32[1,128], index: 10, kind: input, shape index: {}]
  %s11 = inlined_call_operand.vmem [shape: bf16[128,64], index: 11, kind: input, shape index: {}]
  %s12 = inlined_call_operand.vmem [shape: f32[1,64], index: 12, kind: input, shape index: {}]
  %s13 = inlined_call_operand.hbm [shape: f32[2,16,64], index: 13, kind: output, shape index: {}]
  %s14 = sld [smem:[#allocation0]]
  $region101: #{tpu_custom_call.1} parent=0
    _
  %s16 = ssub.s32 1, %s14
  %s17 = scalar_select 0, %s16, %s14
  $region1: #{tpu_custom_call.1} parent=0
    #allocation2 [shape = 'u8[16384]{0}', space=vmem, size = 0x4000, scoped, tag = 'input window, operand 4, single buffered']
    #allocation3 [shape = 's32[2]{0}', space=sflag, size = 0x8, scoped, tag = 'scoped memory for tpu_custom_call.1']
    #allocation4 [shape = 's32[2]{0}', space=sflag, size = 0x8, scoped, tag = 'scoped memory for tpu_custom_call.1']
    #allocation5 [shape = 'u8[16384]{0}', space=vmem, size = 0x4000, scoped, tag = 'input window, operand 6, single buffered']
    #allocation6 [shape = 's32[1]{0}', space=sflag, size = 0x4, scoped, tag = 'scoped memory for tpu_custom_call.1']
    #allocation7 [shape = 'u8[16384]{0}', space=vmem, size = 0x4000, scoped, tag = 'input window, operand 8, single buffered']
    #allocation8 [shape = 'u8[16384]{0}', space=vmem, size = 0x4000, scoped, tag = 'input window, operand 9, single buffered']
    #allocation9 [shape = 's32[1]{0}', space=sflag, size = 0x4, scoped, tag = 'scoped memory for tpu_custom_call.1']
    #allocation10 [shape = 'u8[16384]{0}', space=vmem, size = 0x4000, scoped, tag = 'output window, operand 0']
    %18 = vsyncpa [#allocation3], 0
    %19 = vsyncpa [#allocation6], 0
    %20 = vsyncpa [#allocation9], 0
    %21 = vsyncpa [#allocation4], 0
    %s22 = scalar_lea.sflag [#allocation4], 1
    %23 = vsyncpa %s22, 0
    loop: start=0, step=1, limit=4
    $region2: #{tpu_custom_call.1} parent=1 // loop_pre_header
      _
    $region3: #{tpu_custom_call.1} parent=1 // loop_header
      %s25 = sphi 0, %s29
      %p26 = scmp.ge.s32.totalorder %s25, 4
      %s35 = sphi 0, %s37
      %s38 = sphi 0, %s35
      %s39 = sphi 0, %s38
      %s55 = sphi 0, %s39
      %s61 = sphi 0, %s63
      %s64 = sphi 0, %s61
      %s65 = sphi 0, %s64
      %s81 = sphi 0, %s65
      %s85 = sphi 0, %s85
      %s87 = sphi 0, %s85
      %s88 = sphi 0, %s87
      %s102 = sphi 0, %s88
      %s106 = sphi 0, %s106
      %s108 = sphi 0, %s106
      %s109 = sphi 0, %s108
      %s123 = sphi 0, %s109
      %s127 = sphi 0, %s127
      %s129 = sphi 0, %s127
      %s130 = sphi 0, %s129
      %s144 = sphi 0, %s130
      %s148 = sphi 0, %s148
      %s150 = sphi 0, %s148
      %s151 = sphi 0, %s150
      %s165 = sphi 0, %s151
      %s169 = sphi 0, %s169
      %s171 = sphi 0, %s169
      %s172 = sphi 0, %s171
      %s186 = sphi 0, %s172
      %s190 = sphi 0, %s190
      %s192 = sphi 0, %s190
      %s193 = sphi 0, %s192
      %s207 = sphi 0, %s193
      %s211 = sphi 0, %s211
      %s213 = sphi 0, %s211
      %s214 = sphi 0, %s213
      %s228 = sphi 0, %s214
      %s232 = sphi 0, %s232
      %s234 = sphi 0, %s232
      %s235 = sphi 0, %s234
      %s249 = sphi 0, %s235
      %s253 = sphi 0, %s253
      %s255 = sphi 0, %s253
      %s256 = sphi 0, %s255
      %s270 = sphi 0, %s256
      %s274 = sphi 0, %s274
      %s276 = sphi 0, %s274
      %s277 = sphi 0, %s276
      %s291 = sphi 0, %s277
      %s295 = sphi 0, %s295
      %s297 = sphi 0, %s295
      %s298 = sphi 0, %s297
      %s312 = sphi 0, %s298
      %s318 = sphi 0, %s320
      %s321 = sphi 0, %s318
      %s322 = sphi 0, %s321
      %s338 = sphi 0, %s322
    $region4: #{tpu_custom_call.1} parent=1 // loop_header_branch
      %28 = sbr.rel (%p26) target = $region8
    $region5: #{tpu_custom_call.1} parent=1 // loop_body
      %s30 = ssub.s32 %s25, 1
      %s31 = ssub.s32 %s25, 2
      %s32 = sadd.s32 %s25, 1
      %s33 = ssub.s32 %s25, %s32
      %p34 = scmp.eq.s32.totalorder %s33, 0
      %s36 = sadd.s32 %s35, 1
      %s37 = scalar_select %p34, %s35, %s36
      %p40 = pneg %p34
      %p41 = scmp.eq.s32.totalorder %s25, 1
      %p42 = por %p40, %p41
      %p43 = scmp.ne.s32.totalorder %s35, %s38
      %p44 = scmp.eq.s32.totalorder %s25, 0
      %p45 = por %p43, %p44
      %p46 = scmp.ne.s32.totalorder %s35, %s38
      %p47 = scmp.eq.s32.totalorder %s30, 1
      %p48 = por %p46, %p47
      %p49 = scmp.ne.s32.totalorder %s38, %s39
      %p50 = scmp.eq.s32.totalorder %s30, 0
      %p51 = por %p49, %p50
      %p52 = scmp.ne.s32.totalorder %s38, %s39
      %p53 = scmp.eq.s32.totalorder %s31, 1
      %p54 = por %p52, %p53
      %p56 = scmp.ne.s32.totalorder %s39, %s55
      %p57 = scmp.eq.s32.totalorder %s31, 0
      %p58 = por %p56, %p57
      %s59 = ssub.s32 %s25, %s32
      %p60 = scmp.eq.s32.totalorder %s59, 0
      %s62 = sadd.s32 %s61, 1
      %s63 = scalar_select %p60, %s61, %s62
      %p66 = pneg %p60
      %p67 = scmp.eq.s32.totalorder %s25, 1
      %p68 = por %p66, %p67
      %p69 = scmp.ne.s32.totalorder %s61, %s64
      %p70 = scmp.eq.s32.totalorder %s25, 0
      %p71 = por %p69, %p70
      %p72 = scmp.ne.s32.totalorder %s61, %s64
      %p73 = scmp.eq.s32.totalorder %s30, 1
      %p74 = por %p72, %p73
      %p75 = scmp.ne.s32.totalorder %s64, %s65
      %p76 = scmp.eq.s32.totalorder %s30, 0
      %p77 = por %p75, %p76
      %p78 = scmp.ne.s32.totalorder %s64, %s65
      %p79 = scmp.eq.s32.totalorder %s31, 1
      %p80 = por %p78, %p79
      %p82 = scmp.ne.s32.totalorder %s65, %s81
      %p83 = scmp.eq.s32.totalorder %s31, 0
      %p84 = por %p82, %p83
      %s86 = sadd.s32 %s85, 1
      %p89 = scmp.eq.s32.totalorder %s25, 1
      %p90 = scmp.ne.s32.totalorder %s85, %s87
      %p91 = scmp.eq.s32.totalorder %s25, 0
      %p92 = por %p90, %p91
      %p93 = scmp.ne.s32.totalorder %s85, %s87
      %p94 = scmp.eq.s32.totalorder %s30, 1
      %p95 = por %p93, %p94
      %p96 = scmp.ne.s32.totalorder %s87, %s88
      %p97 = scmp.eq.s32.totalorder %s30, 0
      %p98 = por %p96, %p97
      %p99 = scmp.ne.s32.totalorder %s87, %s88
      %p100 = scmp.eq.s32.totalorder %s31, 1
      %p101 = por %p99, %p100
      %p103 = scmp.ne.s32.totalorder %s88, %s102
      %p104 = scmp.eq.s32.totalorder %s31, 0
      %p105 = por %p103, %p104
      %s107 = sadd.s32 %s106, 1
      %p110 = scmp.eq.s32.totalorder %s25, 1
      %p111 = scmp.ne.s32.totalorder %s106, %s108
      %p112 = scmp.eq.s32.totalorder %s25, 0
      %p113 = por %p111, %p112
      %p114 = scmp.ne.s32.totalorder %s106, %s108
      %p115 = scmp.eq.s32.totalorder %s30, 1
      %p116 = por %p114, %p115
      %p117 = scmp.ne.s32.totalorder %s108, %s109
      %p118 = scmp.eq.s32.totalorder %s30, 0
      %p119 = por %p117, %p118
      %p120 = scmp.ne.s32.totalorder %s108, %s109
      %p121 = scmp.eq.s32.totalorder %s31, 1
      %p122 = por %p120, %p121
      %p124 = scmp.ne.s32.totalorder %s109, %s123
      %p125 = scmp.eq.s32.totalorder %s31, 0
      %p126 = por %p124, %p125
      %s128 = sadd.s32 %s127, 1
      %p131 = scmp.eq.s32.totalorder %s25, 1
      %p132 = scmp.ne.s32.totalorder %s127, %s129
      %p133 = scmp.eq.s32.totalorder %s25, 0
      %p134 = por %p132, %p133
      %p135 = scmp.ne.s32.totalorder %s127, %s129
      %p136 = scmp.eq.s32.totalorder %s30, 1
      %p137 = por %p135, %p136
      %p138 = scmp.ne.s32.totalorder %s129, %s130
      %p139 = scmp.eq.s32.totalorder %s30, 0
      %p140 = por %p138, %p139
      %p141 = scmp.ne.s32.totalorder %s129, %s130
      %p142 = scmp.eq.s32.totalorder %s31, 1
      %p143 = por %p141, %p142
      %p145 = scmp.ne.s32.totalorder %s130, %s144
      %p146 = scmp.eq.s32.totalorder %s31, 0
      %p147 = por %p145, %p146
      %s149 = sadd.s32 %s148, 1
      %p152 = scmp.eq.s32.totalorder %s25, 1
      %p153 = scmp.ne.s32.totalorder %s148, %s150
      %p154 = scmp.eq.s32.totalorder %s25, 0
      %p155 = por %p153, %p154
      %p156 = scmp.ne.s32.totalorder %s148, %s150
      %p157 = scmp.eq.s32.totalorder %s30, 1
      %p158 = por %p156, %p157
      %p159 = scmp.ne.s32.totalorder %s150, %s151
      %p160 = scmp.eq.s32.totalorder %s30, 0
      %p161 = por %p159, %p160
      %p162 = scmp.ne.s32.totalorder %s150, %s151
      %p163 = scmp.eq.s32.totalorder %s31, 1
      %p164 = por %p162, %p163
      %p166 = scmp.ne.s32.totalorder %s151, %s165
      %p167 = scmp.eq.s32.totalorder %s31, 0
      %p168 = por %p166, %p167
      %s170 = sadd.s32 %s169, 1
      %p173 = scmp.eq.s32.totalorder %s25, 1
      %p174 = scmp.ne.s32.totalorder %s169, %s171
      %p175 = scmp.eq.s32.totalorder %s25, 0
      %p176 = por %p174, %p175
      %p177 = scmp.ne.s32.totalorder %s169, %s171
      %p178 = scmp.eq.s32.totalorder %s30, 1
      %p179 = por %p177, %p178
      %p180 = scmp.ne.s32.totalorder %s171, %s172
      %p181 = scmp.eq.s32.totalorder %s30, 0
      %p182 = por %p180, %p181
      %p183 = scmp.ne.s32.totalorder %s171, %s172
      %p184 = scmp.eq.s32.totalorder %s31, 1
      %p185 = por %p183, %p184
      %p187 = scmp.ne.s32.totalorder %s172, %s186
      %p188 = scmp.eq.s32.totalorder %s31, 0
      %p189 = por %p187, %p188
      %s191 = sadd.s32 %s190, 1
      %p194 = scmp.eq.s32.totalorder %s25, 1
      %p195 = scmp.ne.s32.totalorder %s190, %s192
      %p196 = scmp.eq.s32.totalorder %s25, 0
      %p197 = por %p195, %p196
      %p198 = scmp.ne.s32.totalorder %s190, %s192
      %p199 = scmp.eq.s32.totalorder %s30, 1
      %p200 = por %p198, %p199
      %p201 = scmp.ne.s32.totalorder %s192, %s193
      %p202 = scmp.eq.s32.totalorder %s30, 0
      %p203 = por %p201, %p202
      %p204 = scmp.ne.s32.totalorder %s192, %s193
      %p205 = scmp.eq.s32.totalorder %s31, 1
      %p206 = por %p204, %p205
      %p208 = scmp.ne.s32.totalorder %s193, %s207
      %p209 = scmp.eq.s32.totalorder %s31, 0
      %p210 = por %p208, %p209
      %s212 = sadd.s32 %s211, 1
      %p215 = scmp.eq.s32.totalorder %s25, 1
      %p216 = scmp.ne.s32.totalorder %s211, %s213
      %p217 = scmp.eq.s32.totalorder %s25, 0
      %p218 = por %p216, %p217
      %p219 = scmp.ne.s32.totalorder %s211, %s213
      %p220 = scmp.eq.s32.totalorder %s30, 1
      %p221 = por %p219, %p220
      %p222 = scmp.ne.s32.totalorder %s213, %s214
      %p223 = scmp.eq.s32.totalorder %s30, 0
      %p224 = por %p222, %p223
      %p225 = scmp.ne.s32.totalorder %s213, %s214
      %p226 = scmp.eq.s32.totalorder %s31, 1
      %p227 = por %p225, %p226
      %p229 = scmp.ne.s32.totalorder %s214, %s228
      %p230 = scmp.eq.s32.totalorder %s31, 0
      %p231 = por %p229, %p230
      %s233 = sadd.s32 %s232, 1
      %p236 = scmp.eq.s32.totalorder %s25, 1
      %p237 = scmp.ne.s32.totalorder %s232, %s234
      %p238 = scmp.eq.s32.totalorder %s25, 0
      %p239 = por %p237, %p238
      %p240 = scmp.ne.s32.totalorder %s232, %s234
      %p241 = scmp.eq.s32.totalorder %s30, 1
      %p242 = por %p240, %p241
      %p243 = scmp.ne.s32.totalorder %s234, %s235
      %p244 = scmp.eq.s32.totalorder %s30, 0
      %p245 = por %p243, %p244
      %p246 = scmp.ne.s32.totalorder %s234, %s235
      %p247 = scmp.eq.s32.totalorder %s31, 1
      %p248 = por %p246, %p247
      %p250 = scmp.ne.s32.totalorder %s235, %s249
      %p251 = scmp.eq.s32.totalorder %s31, 0
      %p252 = por %p250, %p251
      %s254 = sadd.s32 %s253, 1
      %p257 = scmp.eq.s32.totalorder %s25, 1
      %p258 = scmp.ne.s32.totalorder %s253, %s255
      %p259 = scmp.eq.s32.totalorder %s25, 0
      %p260 = por %p258, %p259
      %p261 = scmp.ne.s32.totalorder %s253, %s255
      %p262 = scmp.eq.s32.totalorder %s30, 1
      %p263 = por %p261, %p262
      %p264 = scmp.ne.s32.totalorder %s255, %s256
      %p265 = scmp.eq.s32.totalorder %s30, 0
      %p266 = por %p264, %p265
      %p267 = scmp.ne.s32.totalorder %s255, %s256
      %p268 = scmp.eq.s32.totalorder %s31, 1
      %p269 = por %p267, %p268
      %p271 = scmp.ne.s32.totalorder %s256, %s270
      %p272 = scmp.eq.s32.totalorder %s31, 0
      %p273 = por %p271, %p272
      %s275 = sadd.s32 %s274, 1
      %p278 = scmp.eq.s32.totalorder %s25, 1
      %p279 = scmp.ne.s32.totalorder %s274, %s276
      %p280 = scmp.eq.s32.totalorder %s25, 0
      %p281 = por %p279, %p280
      %p282 = scmp.ne.s32.totalorder %s274, %s276
      %p283 = scmp.eq.s32.totalorder %s30, 1
      %p284 = por %p282, %p283
      %p285 = scmp.ne.s32.totalorder %s276, %s277
      %p286 = scmp.eq.s32.totalorder %s30, 0
      %p287 = por %p285, %p286
      %p288 = scmp.ne.s32.totalorder %s276, %s277
      %p289 = scmp.eq.s32.totalorder %s31, 1
      %p290 = por %p288, %p289
      %p292 = scmp.ne.s32.totalorder %s277, %s291
      %p293 = scmp.eq.s32.totalorder %s31, 0
      %p294 = por %p292, %p293
      %s296 = sadd.s32 %s295, 1
      %p299 = scmp.eq.s32.totalorder %s25, 1
      %p300 = scmp.ne.s32.totalorder %s295, %s297
      %p301 = scmp.eq.s32.totalorder %s25, 0
      %p302 = por %p300, %p301
      %p303 = scmp.ne.s32.totalorder %s295, %s297
      %p304 = scmp.eq.s32.totalorder %s30, 1
      %p305 = por %p303, %p304
      %p306 = scmp.ne.s32.totalorder %s297, %s298
      %p307 = scmp.eq.s32.totalorder %s30, 0
      %p308 = por %p306, %p307
      %p309 = scmp.ne.s32.totalorder %s297, %s298
      %p310 = scmp.eq.s32.totalorder %s31, 1
      %p311 = por %p309, %p310
      %p313 = scmp.ne.s32.totalorder %s298, %s312
      %p314 = scmp.eq.s32.totalorder %s31, 0
      %p315 = por %p313, %p314
      %s316 = ssub.s32 %s25, %s32
      %p317 = scmp.eq.s32.totalorder %s316, 0
      %s319 = sadd.s32 %s318, 1
      %s320 = scalar_select %p317, %s318, %s319
      %p323 = pneg %p317
      %p324 = scmp.eq.s32.totalorder %s25, 1
      %p325 = por %p323, %p324
      %p326 = scmp.ne.s32.totalorder %s318, %s321
      %p327 = scmp.eq.s32.totalorder %s25, 0
      %p328 = por %p326, %p327
      %p329 = scmp.ne.s32.totalorder %s318, %s321
      %p330 = scmp.eq.s32.totalorder %s30, 1
      %p331 = por %p329, %p330
      %p332 = scmp.ne.s32.totalorder %s321, %s322
      %p333 = scmp.eq.s32.totalorder %s30, 0
      %p334 = por %p332, %p333
      %p335 = scmp.ne.s32.totalorder %s321, %s322
      %p336 = scmp.eq.s32.totalorder %s31, 1
      %p337 = por %p335, %p336
      %p339 = scmp.ne.s32.totalorder %s322, %s338
      %p340 = scmp.eq.s32.totalorder %s31, 0
      %p341 = por %p339, %p340
      %p342 = scmp.le.s32.totalorder 1, %s25
      %p343 = scmp.lt.s32.totalorder %s25, 3
      %p344 = pnand %p342, %p343
      %p345 = pneg %p344
      // Predicated region
      $region9: #{tpu_custom_call.1} parent=5 // pred_check
        _
      $region10: #{tpu_custom_call.1} parent=5 // pred_check_branch
        %347 = sbr.rel (%p344) target = $region12
      $region11: #{tpu_custom_call.1} parent=5 // pred_region
        %s348 = ssub.s32 %s25, 1
        // Predicated region
        $region13: #{tpu_custom_call.1} parent=11 // pred_check
          %p349 = pneg %p98
        $region14: #{tpu_custom_call.1} parent=11 // pred_check_branch
          %351 = sbr.rel (%p349) target = $region16
        $region15: #{tpu_custom_call.1} parent=11 // pred_region
          _
        $region16: #{tpu_custom_call.1} parent=11 // pred_fallthru
          _
        // Predicated region
        $region17: #{tpu_custom_call.1} parent=11 // pred_check
          %p352 = pneg %p119
        $region18: #{tpu_custom_call.1} parent=11 // pred_check_branch
          %354 = sbr.rel (%p352) target = $region20
        $region19: #{tpu_custom_call.1} parent=11 // pred_region
          _
        $region20: #{tpu_custom_call.1} parent=11 // pred_fallthru
          _
        // Predicated region
        $region21: #{tpu_custom_call.1} parent=11 // pred_check
          %p355 = pneg %p140
        $region22: #{tpu_custom_call.1} parent=11 // pred_check_branch
          %357 = sbr.rel (%p355) target = $region24
        $region23: #{tpu_custom_call.1} parent=11 // pred_region
          %359 = vsyncadd [#allocation3], 0
          %s360 = sshll.u32 %s4, 4
          %s361 = int_to_ptr.hbm [resolvable:$true] %s360
          %s362 = sshll.u32 [#allocation2], 4
          %s363 = int_to_ptr.vmem [resolvable:$true] %s362
          %368 = dma.hbm_to_vmem [thread:$0]  %s361, 512, %s363, [#allocation3], 64, 64, 4
        $region24: #{tpu_custom_call.1} parent=11 // pred_fallthru
          _
        // Predicated region
        $region25: #{tpu_custom_call.1} parent=11 // pred_check
          %p369 = pneg %p161
        $region26: #{tpu_custom_call.1} parent=11 // pred_check_branch
          %371 = sbr.rel (%p369) target = $region28
        $region27: #{tpu_custom_call.1} parent=11 // pred_region
          _
        $region28: #{tpu_custom_call.1} parent=11 // pred_fallthru
          _
        // Predicated region
        $region29: #{tpu_custom_call.1} parent=11 // pred_check
          %p372 = pneg %p182
        $region30: #{tpu_custom_call.1} parent=11 // pred_check_branch
          %374 = sbr.rel (%p372) target = $region32
        $region31: #{tpu_custom_call.1} parent=11 // pred_region
          %376 = vsyncadd [#allocation6], 0
          %s377 = sshll.u32 %s6, 4
          %s378 = int_to_ptr.hbm [resolvable:$true] %s377
          %s379 = sshll.u32 [#allocation5], 4
          %s380 = int_to_ptr.vmem [resolvable:$true] %s379
          %385 = dma.hbm_to_vmem [thread:$0]  %s378, 512, %s380, [#allocation6], 64, 64, 4
        $region32: #{tpu_custom_call.1} parent=11 // pred_fallthru
          _
        // Predicated region
        $region33: #{tpu_custom_call.1} parent=11 // pred_check
          %p386 = pneg %p203
        $region34: #{tpu_custom_call.1} parent=11 // pred_check_branch
          %388 = sbr.rel (%p386) target = $region36
        $region35: #{tpu_custom_call.1} parent=11 // pred_region
          _
        $region36: #{tpu_custom_call.1} parent=11 // pred_fallthru
          _
        // Predicated region
        $region37: #{tpu_custom_call.1} parent=11 // pred_check
          %p389 = pneg %p224
        $region38: #{tpu_custom_call.1} parent=11 // pred_check_branch
          %391 = sbr.rel (%p389) target = $region40
        $region39: #{tpu_custom_call.1} parent=11 // pred_region
          %393 = vsyncadd [#allocation6], 0
          %s394 = sshll.u32 %s8, 4
          %s395 = int_to_ptr.hbm [resolvable:$true] %s394
          %s396 = sshll.u32 [#allocation7], 4
          %s397 = int_to_ptr.vmem [resolvable:$true] %s396
          %402 = dma.hbm_to_vmem [thread:$0]  %s395, 512, %s397, [#allocation6], 64, 64, 4
        $region40: #{tpu_custom_call.1} parent=11 // pred_fallthru
          _
        // Predicated region
        $region41: #{tpu_custom_call.1} parent=11 // pred_check
          %p403 = pneg %p245
        $region42: #{tpu_custom_call.1} parent=11 // pred_check_branch
          %405 = sbr.rel (%p403) target = $region44
        $region43: #{tpu_custom_call.1} parent=11 // pred_region
          %407 = vsyncadd [#allocation9], 0
          %s408 = sshll.u32 %s9, 4
          %s409 = int_to_ptr.hbm [resolvable:$true] %s408
          %s410 = sshll.u32 [#allocation8], 4
          %s411 = int_to_ptr.vmem [resolvable:$true] %s410
          %416 = dma.hbm_to_vmem [thread:$0]  %s409, 512, %s411, [#allocation9], 64, 64, 4
        $region44: #{tpu_custom_call.1} parent=11 // pred_fallthru
          _
        // Predicated region
        $region45: #{tpu_custom_call.1} parent=11 // pred_check
          %p417 = pneg %p266
        $region46: #{tpu_custom_call.1} parent=11 // pred_check_branch
          %419 = sbr.rel (%p417) target = $region48
        $region47: #{tpu_custom_call.1} parent=11 // pred_region
          _
        $region48: #{tpu_custom_call.1} parent=11 // pred_fallthru
          _
        // Predicated region
        $region49: #{tpu_custom_call.1} parent=11 // pred_check
          %p420 = pneg %p287
        $region50: #{tpu_custom_call.1} parent=11 // pred_check_branch
          %422 = sbr.rel (%p420) target = $region52
        $region51: #{tpu_custom_call.1} parent=11 // pred_region
          _
        $region52: #{tpu_custom_call.1} parent=11 // pred_fallthru
          _
        // Predicated region
        $region53: #{tpu_custom_call.1} parent=11 // pred_check
          %p423 = pneg %p308
        $region54: #{tpu_custom_call.1} parent=11 // pred_check_branch
          %425 = sbr.rel (%p423) target = $region56
        $region55: #{tpu_custom_call.1} parent=11 // pred_region
          _
        $region56: #{tpu_custom_call.1} parent=11 // pred_fallthru
          _
      $region12: #{tpu_custom_call.1} parent=5 // pred_fallthru
        _
      %p426 = scmp.lt.s32.totalorder %s25, 2
      // Predicated region
      $region57: #{tpu_custom_call.1} parent=5 // pred_check
        %p427 = pneg %p426
      $region58: #{tpu_custom_call.1} parent=5 // pred_check_branch
        %429 = sbr.rel (%p427) target = $region60
      $region59: #{tpu_custom_call.1} parent=5 // pred_region
        // Predicated region
        $region61: #{tpu_custom_call.1} parent=59 // pred_check
          %p430 = pneg %p45
        $region62: #{tpu_custom_call.1} parent=59 // pred_check_branch
          %432 = sbr.rel (%p430) target = $region64
        $region63: #{tpu_custom_call.1} parent=59 // pred_region
          %p433 = scmp.lt.s32.totalorder %s25, 1
          %s434 = scalar_select %p433, %s25, 1
          %s435 = smul.addr %s434, 2
          %s436 = smul.addr %s435, 8
          %s437 = scalar_lea.vmem %s0, %s436
        $region64: #{tpu_custom_call.1} parent=59 // pred_fallthru
          _
        // Predicated region
        $region65: #{tpu_custom_call.1} parent=59 // pred_check
          %p438 = pneg %p71
        $region66: #{tpu_custom_call.1} parent=59 // pred_check_branch
          %440 = sbr.rel (%p438) target = $region68
        $region67: #{tpu_custom_call.1} parent=59 // pred_region
          %p441 = scmp.lt.s32.totalorder %s25, 1
          %s442 = scalar_select %p441, %s25, 1
          %s443 = smul.addr %s442, 2
          %s444 = smul.addr %s443, 8
          %s445 = scalar_lea.vmem %s1, %s444
        $region68: #{tpu_custom_call.1} parent=59 // pred_fallthru
          _
      $region60: #{tpu_custom_call.1} parent=5 // pred_fallthru
        _
      %p446 = scmp.le.s32.totalorder 1, %s25
      %p447 = scmp.lt.s32.totalorder %s25, 3
      %p448 = pnand %p446, %p447
      %p449 = pneg %p448
      // Predicated region
      $region69: #{tpu_custom_call.1} parent=5 // pred_check
        _
      $region70: #{tpu_custom_call.1} parent=5 // pred_check_branch
        %451 = sbr.rel (%p448) target = $region72
      $region71: #{tpu_custom_call.1} parent=5 // pred_region
        %s452 = ssub.s32 %s25, 1
        // Predicated region
        $region73: #{tpu_custom_call.1} parent=71 // pred_check
          %p453 = pneg %p140
        $region74: #{tpu_custom_call.1} parent=71 // pred_check_branch
          %455 = sbr.rel (%p453) target = $region76
        $region75: #{tpu_custom_call.1} parent=71 // pred_region
          %457 = dma.done [#allocation3], 512
        $region76: #{tpu_custom_call.1} parent=71 // pred_fallthru
          _
        // Predicated region
        $region77: #{tpu_custom_call.1} parent=71 // pred_check
          %p458 = pneg %p182
        $region78: #{tpu_custom_call.1} parent=71 // pred_check_branch
          %460 = sbr.rel (%p458) target = $region80
        $region79: #{tpu_custom_call.1} parent=71 // pred_region
          %462 = dma.done [#allocation6], 512
        $region80: #{tpu_custom_call.1} parent=71 // pred_fallthru
          _
        // Predicated region
        $region81: #{tpu_custom_call.1} parent=71 // pred_check
          %p463 = pneg %p224
        $region82: #{tpu_custom_call.1} parent=71 // pred_check_branch
          %465 = sbr.rel (%p463) target = $region84
        $region83: #{tpu_custom_call.1} parent=71 // pred_region
          %467 = dma.done [#allocation6], 512
        $region84: #{tpu_custom_call.1} parent=71 // pred_fallthru
          _
        // Predicated region
        $region85: #{tpu_custom_call.1} parent=71 // pred_check
          %p468 = pneg %p245
        $region86: #{tpu_custom_call.1} parent=71 // pred_check_branch
          %470 = sbr.rel (%p468) target = $region88
        $region87: #{tpu_custom_call.1} parent=71 // pred_region
          %472 = dma.done [#allocation9], 512
        $region88: #{tpu_custom_call.1} parent=71 // pred_fallthru
          _
        %p473 = scmp.lt.s32.totalorder %s30, 1
        %s474 = scalar_select %p473, %s30, 1
        %s475 = smul.addr %s474, 2
        %s476 = smul.addr %s475, 8
        %s477 = scalar_lea.vmem %s0, %s476
        %p478 = pneg %p51
        %p479 = pneg %p48
        %p480 = scmp.lt.s32.totalorder %s30, 1
        %s481 = scalar_select %p480, %s30, 1
        %s482 = smul.addr %s481, 2
        %s483 = smul.addr %s482, 8
        %s484 = scalar_lea.vmem %s1, %s483
        %p485 = pneg %p77
        %p486 = pneg %p74
        %p487 = pneg %p98
        %p488 = pneg %p95
        %p489 = pneg %p119
        %p490 = pneg %p116
        %p491 = pneg %p140
        %p492 = pneg %p137
        %p493 = pneg %p161
        %p494 = pneg %p158
        %p495 = pneg %p182
        %p496 = pneg %p179
        %p497 = pneg %p203
        %p498 = pneg %p200
        %p499 = pneg %p224
        %p500 = pneg %p221
        %p501 = pneg %p245
        %p502 = pneg %p242
        %p503 = pneg %p266
        %p504 = pneg %p263
        %p505 = pneg %p287
        %p506 = pneg %p284
        %p507 = pneg %p308
        %p508 = pneg %p305
        %p509 = pneg %p334
        %p510 = pneg %p331
        %s511 = sand.u32 %s321, 1
        %s512 = scalar_lea.sflag [#allocation4], %s511
        %s513 = sand.u32 %s321, 1
        %s514 = smul.addr %s513, 16
        %s515 = scalar_lea.vmem [#allocation10], %s514
        %p516 = scmp.lt.s32.totalorder %s30, 1
        %s517 = scalar_select %p516, %s30, 1
        %s518 = smul.addr %s517, 2
        %s519 = smul.addr %s518, 8
        %s520 = scalar_lea.vmem %s0, %s519
        %p521 = scmp.lt.s32.totalorder %s30, 1
        %s522 = scalar_select %p521, %s30, 1
        %s523 = smul.addr %s522, 2
        %s524 = smul.addr %s523, 8
        %s525 = scalar_lea.vmem %s1, %s524
        %v527 = vld [vmem:[%s520] sm:$0xff]
        %v528 = vld [vmem:[%s520 + $0x8] sm:$0xff]
        %v529 = vld [vmem:[%s525] sm:$0xff]
        %v530 = vld [vmem:[%s525 + $0x8] sm:$0xff]
        %v531 = vpack.c.bf16 %v528, %v527
        %v532 = vpack.c.bf16 %v530, %v529
        %v533 = vld [vmem:[%s2] sm:$0xf]
        %v534 = vld [vmem:[%s2 + $0x4] sm:$0xf]
        %v535 = vld [vmem:[%s2 + $0x8] sm:$0xf]
        %v536 = vld [vmem:[%s2 + $0xc] sm:$0xf]
        %v537 = vld [vmem:[%s2 + $0x10] sm:$0xf]
        %v538 = vld [vmem:[%s2 + $0x14] sm:$0xf]
        %v539 = vld [vmem:[%s2 + $0x18] sm:$0xf]
        %v540 = vld [vmem:[%s2 + $0x1c] sm:$0xf]
        %v541 = vld [vmem:[%s3] sm:$0x1]
        %v543 = vperm.slane %v541, 0
        %v553 = vunpack.c.l.b16 %v533
        %v554 = vunpack.c.l.b16 %v534
        %v555 = vunpack.c.l.b16 %v535
        %v556 = vunpack.c.l.b16 %v536
        %v557 = vunpack.c.l.b16 %v537
        %v558 = vunpack.c.l.b16 %v538
        %v559 = vunpack.c.l.b16 %v539
        %v560 = vunpack.c.l.b16 %v540
        %v561 = vpack.c.b16 %v554, %v553
        %v562 = vpack.c.b16 %v556, %v555
        %v563 = vpack.c.b16 %v558, %v557
        %v564 = vpack.c.b16 %v560, %v559
        %vm569 = vcmask 523264
        %v571 = vsel %vm569, %v531, 0
        %573 = vmatpush.bf16.msra.mxu0 0
        %574 = vmatpush.bf16.msra.mxu0 0
        %575 = vmatpush.bf16.msra.mxu0 0
        %576 = vmatpush.bf16.msra.mxu0 0
        %577 = vmatpush.bf16.msra.mxu0 %v564
        %578 = vmatpush.bf16.msra.mxu0 %v563
        %579 = vmatpush.bf16.msra.mxu0 %v562
        %580 = vmatpush.bf16.msra.mxu0 %v561
        %581 = vmatmul.bf16.gmra.mxu0 %v571
        %v582 = vpop.f32.mrf.mxu0
        %v583 = vadd.f32 %v543, %v582
        %v584 = vpop.f32.mrf.mxu0
        %v585 = vadd.f32 %v543, %v584
        %586 = vdwg.mxu0
        %v587 = vld [vmem:[#allocation2] sm:$0xf]
        %v588 = vld [vmem:[#allocation2 + $0x4] sm:$0xf]
        %v589 = vld [vmem:[#allocation2 + $0x8] sm:$0xf]
        %v590 = vld [vmem:[#allocation2 + $0xc] sm:$0xf]
        %v591 = vld [vmem:[#allocation2 + $0x10] sm:$0xf]
        %v592 = vld [vmem:[#allocation2 + $0x14] sm:$0xf]
        %v593 = vld [vmem:[#allocation2 + $0x18] sm:$0xf]
        %v594 = vld [vmem:[#allocation2 + $0x1c] sm:$0xf]
        %v595 = vld [vmem:[%s5] sm:$0x1]
        %v597 = vperm.slane %v595, 0
        %v607 = vunpack.c.l.b16 %v587
        %v608 = vunpack.c.l.b16 %v588
        %v609 = vunpack.c.l.b16 %v589
        %v610 = vunpack.c.l.b16 %v590
        %v611 = vunpack.c.l.b16 %v591
        %v612 = vunpack.c.l.b16 %v592
        %v613 = vunpack.c.l.b16 %v593
        %v614 = vunpack.c.l.b16 %v594
        %v615 = vpack.c.b16 %v608, %v607
        %v616 = vpack.c.b16 %v610, %v609
        %v617 = vpack.c.b16 %v612, %v611
        %v618 = vpack.c.b16 %v614, %v613
        %v624 = vsel %vm569, %v532, 0
        %626 = vmatpush.bf16.msra.mxu0 0
        %627 = vmatpush.bf16.msra.mxu0 0
        %628 = vmatpush.bf16.msra.mxu0 0
        %629 = vmatpush.bf16.msra.mxu0 0
        %630 = vmatpush.bf16.msra.mxu0 %v618
        %631 = vmatpush.bf16.msra.mxu0 %v617
        %632 = vmatpush.bf16.msra.mxu0 %v616
        %633 = vmatpush.bf16.msra.mxu0 %v615
        %634 = vmatmul.bf16.gmra.mxu0 %v624
        %v635 = vpop.f32.mrf.mxu0
        %v636 = vadd.f32 %v597, %v635
        %v637 = vpop.f32.mrf.mxu0
        %v638 = vadd.f32 %v597, %v637
        %639 = vdwg.mxu0
        %v640 = vpack.c.bf16 %v583, %v583
        %v641 = vpack.c.bf16 %v585, %v585
        %v642 = vpack.c.bf16 %v636, %v636
        %v643 = vpack.c.bf16 %v638, %v638
        %v644 = vld [vmem:[#allocation5] sm:$0xf]
        %v645 = vld [vmem:[#allocation5 + $0x4] sm:$0xf]
        %v646 = vld [vmem:[#allocation5 + $0x8] sm:$0xf]
        %v647 = vld [vmem:[#allocation5 + $0xc] sm:$0xf]
        %v648 = vld [vmem:[#allocation5 + $0x10] sm:$0xf]
        %v649 = vld [vmem:[#allocation5 + $0x14] sm:$0xf]
        %v650 = vld [vmem:[#allocation5 + $0x18] sm:$0xf]
        %v651 = vld [vmem:[#allocation5 + $0x1c] sm:$0xf]
        %v652 = vld [vmem:[%s7] sm:$0x1]
        %v655 = vunpack.c.l.b16 %v640
        %v656 = vunpack.c.l.b16 %v641
        %v657 = vpack.c.b16 %v656, %v655
        %v660 = vunpack.c.l.b16 %v642
        %v661 = vunpack.c.l.b16 %v643
        %v662 = vpack.c.b16 %v661, %v660
        %vm663 = vcmask 130048
        %v665 = vsel %vm663, %v657, 0
        %v668 = vsel %vm663, %v662, 0
        %670 = vmatpush.bf16.xpose.msra.mxu0 0
        %671 = vmatpush.bf16.xpose.msra.mxu0 0
        %672 = vmatpush.bf16.xpose.msra.mxu0 0
        %673 = vmatpush.bf16.xpose.msra.mxu0 0
        %674 = vmatpush.bf16.xpose.msra.mxu0 0
        %675 = vmatpush.bf16.xpose.msra.mxu0 0
        %676 = vmatpush.bf16.xpose.msra.mxu0 0
        %677 = vmatpush.bf16.xpose.msra.mxu0 %v668
        %678 = vmatmul.bf16.gmra.mxu0 %v665
        %v679 = vpop.f32.mrf.mxu0
        %v680 = vadd.f32 0.0, %v679
        %v681 = vpop.f32.mrf.mxu0
        %v682 = vadd.f32 0.0, %v681
        %683 = vdwg.mxu0
        %v684 = vmul.f32 %v680, 0.25
        %v685 = vmul.f32 %v682, 0.25
        %v686 = vsel %vm663, %v684, -inf
        %687 = vmax.xlane.f32.xlu0 %v686
        %v688 = vpop.xlane.xlu0 %687
        %v689 = vsel %vm663, %v685, -inf
        %690 = vmax.xlane.f32.xlu0 %v689
        %v691 = vpop.xlane.xlu0 %690
        %v692 = vsub.f32 %v684, %v688
        %v693 = vsub.f32 %v685, %v691
        %v694 = vmul.f32 %v692, 1.442695
        %v695 = vpow.pop %v694
        %v696 = vmul.f32 %v693, 1.442695
        %v697 = vpow.pop %v696
        %v698 = vsel %vm663, %v695, 0.0
        %699 = vadd.xlane.f32.xlu0 %v698
        %v700 = vpop.xlane.xlu0 %699
        %v701 = vsel %vm663, %v697, 0.0
        %702 = vadd.xlane.f32.xlu0 %v701
        %v703 = vpop.xlane.xlu0 %702
        %v704 = vrcp.pop %v700
        %v705 = vrcp.pop %v703
        %v706 = vmul.f32 %v695, %v704
        %v707 = vmul.f32 %v697, %v705
        %v708 = vpack.c.bf16 %v707, %v706
        %709 = vrot.lane.b32.xlu0 %v662, 64
        %v710 = vpop.permute.xlu0 %709
        %v713 = vsel %vm663, %v708, 0
        %715 = vmatpush.bf16.msra.mxu0 0
        %716 = vmatpush.bf16.msra.mxu0 0
        %717 = vmatpush.bf16.msra.mxu0 0
        %718 = vmatpush.bf16.msra.mxu0 0
        %719 = vmatpush.bf16.msra.mxu0 0
        %720 = vmatpush.bf16.msra.mxu0 0
        %721 = vmatpush.bf16.msra.mxu0 0
        %722 = vmatpush.bf16.msra.mxu0 %v710
        %723 = vmatmul.bf16.gmra.mxu0 %v713
        %v724 = vpop.f32.mrf.mxu0
        %v725 = vadd.f32 0.0, %v724
        %v726 = vpop.f32.mrf.mxu0
        %v727 = vadd.f32 0.0, %v726
        %728 = vdwg.mxu0
        %v729 = vpack.c.bf16 %v727, %v725
        %v732 = vunpack.c.l.b16 %v644
        %v733 = vunpack.c.l.b16 %v645
        %v734 = vpack.c.b16 %v733, %v732
        %v737 = vsel %vm663, %v729, 0
        %739 = vmatpush.bf16.msra.mxu0 0
        %740 = vmatpush.bf16.msra.mxu0 0
        %741 = vmatpush.bf16.msra.mxu0 0
        %742 = vmatpush.bf16.msra.mxu0 0
        %743 = vmatpush.bf16.msra.mxu0 0
        %744 = vmatpush.bf16.msra.mxu0 0
        %745 = vmatpush.bf16.msra.mxu0 0
        %746 = vmatpush.bf16.msra.mxu0 %v734
        %747 = vmatmul.bf16.gmra.mxu0 %v737
        %v748 = vpop.f32.mrf.mxu0
        %v749 = vadd.f32 0.0, %v748
        %v750 = vpop.f32.mrf.mxu0
        %v751 = vadd.f32 0.0, %v750
        %752 = vdwg.mxu0
        %v754 = vperm.slane %v652, 0
        %v756 = vadd.f32 %v754, %v749
        %v757 = vadd.f32 %v754, %v751
        %758 = vrot.lane.b32.xlu0 %v657, 112
        %v759 = vpop.permute.xlu0 %758
        %760 = vrot.lane.b32.xlu0 %v662, 112
        %v761 = vpop.permute.xlu0 %760
        %v763 = vsel %vm663, %v759, 0
        %v766 = vsel %vm663, %v761, 0
        %768 = vmatpush.bf16.xpose.msra.mxu0 0
        %769 = vmatpush.bf16.xpose.msra.mxu0 0
        %770 = vmatpush.bf16.xpose.msra.mxu0 0
        %771 = vmatpush.bf16.xpose.msra.mxu0 0
        %772 = vmatpush.bf16.xpose.msra.mxu0 0
        %773 = vmatpush.bf16.xpose.msra.mxu0 0
        %774 = vmatpush.bf16.xpose.msra.mxu0 0
        %775 = vmatpush.bf16.xpose.msra.mxu0 %v766
        %776 = vmatmul.bf16.gmra.mxu0 %v763
        %v777 = vpop.f32.mrf.mxu0
        %v778 = vadd.f32 0.0, %v777
        %v779 = vpop.f32.mrf.mxu0
        %v780 = vadd.f32 0.0, %v779
        %781 = vdwg.mxu0
        %v782 = vmul.f32 %v778, 0.25
        %v783 = vmul.f32 %v780, 0.25
        %v784 = vsel %vm663, %v782, -inf
        %785 = vmax.xlane.f32.xlu0 %v784
        %v786 = vpop.xlane.xlu0 %785
        %v787 = vsel %vm663, %v783, -inf
        %788 = vmax.xlane.f32.xlu0 %v787
        %v789 = vpop.xlane.xlu0 %788
        %v790 = vsub.f32 %v782, %v786
        %v791 = vsub.f32 %v783, %v789
        %v792 = vmul.f32 %v790, 1.442695
        %v793 = vpow.pop %v792
        %v794 = vmul.f32 %v791, 1.442695
        %v795 = vpow.pop %v794
        %v796 = vsel %vm663, %v793, 0.0
        %797 = vadd.xlane.f32.xlu0 %v796
        %v798 = vpop.xlane.xlu0 %797
        %v799 = vsel %vm663, %v795, 0.0
        %800 = vadd.xlane.f32.xlu0 %v799
        %v801 = vpop.xlane.xlu0 %800
        %v802 = vrcp.pop %v798
        %v803 = vrcp.pop %v801
        %v804 = vmul.f32 %v793, %v802
        %v805 = vmul.f32 %v795, %v803
        %v806 = vpack.c.bf16 %v805, %v804
        %807 = vrot.lane.b32.xlu0 %v662, 48
        %v808 = vpop.permute.xlu0 %807
        %v811 = vsel %vm663, %v806, 0
        %813 = vmatpush.bf16.msra.mxu0 0
        %814 = vmatpush.bf16.msra.mxu0 0
        %815 = vmatpush.bf16.msra.mxu0 0
        %816 = vmatpush.bf16.msra.mxu0 0
        %817 = vmatpush.bf16.msra.mxu0 0
        %818 = vmatpush.bf16.msra.mxu0 0
        %819 = vmatpush.bf16.msra.mxu0 0
        %820 = vmatpush.bf16.msra.mxu0 %v808
        %821 = vmatmul.bf16.gmra.mxu0 %v811
        %v822 = vpop.f32.mrf.mxu0
        %v823 = vadd.f32 0.0, %v822
        %v824 = vpop.f32.mrf.mxu0
        %v825 = vadd.f32 0.0, %v824
        %826 = vdwg.mxu0
        %v827 = vpack.c.bf16 %v825, %v823
        %v830 = vunpack.c.l.b16 %v646
        %v831 = vunpack.c.l.b16 %v647
        %v832 = vpack.c.b16 %v831, %v830
        %v835 = vsel %vm663, %v827, 0
        %837 = vmatpush.bf16.msra.mxu0 0
        %838 = vmatpush.bf16.msra.mxu0 0
        %839 = vmatpush.bf16.msra.mxu0 0
        %840 = vmatpush.bf16.msra.mxu0 0
        %841 = vmatpush.bf16.msra.mxu0 0
        %842 = vmatpush.bf16.msra.mxu0 0
        %843 = vmatpush.bf16.msra.mxu0 0
        %844 = vmatpush.bf16.msra.mxu0 %v832
        %845 = vmatmul.bf16.gmra.mxu0 %v835
        %v846 = vpop.f32.mrf.mxu0
        %v847 = vadd.f32 0.0, %v846
        %v848 = vpop.f32.mrf.mxu0
        %v849 = vadd.f32 0.0, %v848
        %850 = vdwg.mxu0
        %v851 = vadd.f32 %v756, %v847
        %v852 = vadd.f32 %v757, %v849
        %853 = vrot.lane.b32.xlu0 %v657, 96
        %v854 = vpop.permute.xlu0 %853
        %855 = vrot.lane.b32.xlu0 %v662, 96
        %v856 = vpop.permute.xlu0 %855
        %v858 = vsel %vm663, %v854, 0
        %v861 = vsel %vm663, %v856, 0
        %863 = vmatpush.bf16.xpose.msra.mxu0 0
        %864 = vmatpush.bf16.xpose.msra.mxu0 0
        %865 = vmatpush.bf16.xpose.msra.mxu0 0
        %866 = vmatpush.bf16.xpose.msra.mxu0 0
        %867 = vmatpush.bf16.xpose.msra.mxu0 0
        %868 = vmatpush.bf16.xpose.msra.mxu0 0
        %869 = vmatpush.bf16.xpose.msra.mxu0 0
        %870 = vmatpush.bf16.xpose.msra.mxu0 %v861
        %871 = vmatmul.bf16.gmra.mxu0 %v858
        %v872 = vpop.f32.mrf.mxu0
        %v873 = vadd.f32 0.0, %v872
        %v874 = vpop.f32.mrf.mxu0
        %v875 = vadd.f32 0.0, %v874
        %876 = vdwg.mxu0
        %v877 = vmul.f32 %v873, 0.25
        %v878 = vmul.f32 %v875, 0.25
        %v879 = vsel %vm663, %v877, -inf
        %880 = vmax.xlane.f32.xlu0 %v879
        %v881 = vpop.xlane.xlu0 %880
        %v882 = vsel %vm663, %v878, -inf
        %883 = vmax.xlane.f32.xlu0 %v882
        %v884 = vpop.xlane.xlu0 %883
        %v885 = vsub.f32 %v877, %v881
        %v886 = vsub.f32 %v878, %v884
        %v887 = vmul.f32 %v885, 1.442695
        %v888 = vpow.pop %v887
        %v889 = vmul.f32 %v886, 1.442695
        %v890 = vpow.pop %v889
        %v891 = vsel %vm663, %v888, 0.0
        %892 = vadd.xlane.f32.xlu0 %v891
        %v893 = vpop.xlane.xlu0 %892
        %v894 = vsel %vm663, %v890, 0.0
        %895 = vadd.xlane.f32.xlu0 %v894
        %v896 = vpop.xlane.xlu0 %895
        %v897 = vrcp.pop %v893
        %v898 = vrcp.pop %v896
        %v899 = vmul.f32 %v888, %v897
        %v900 = vmul.f32 %v890, %v898
        %v901 = vpack.c.bf16 %v900, %v899
        %902 = vrot.lane.b32.xlu0 %v662, 32
        %v903 = vpop.permute.xlu0 %902
        %v906 = vsel %vm663, %v901, 0
        %908 = vmatpush.bf16.msra.mxu0 0
        %909 = vmatpush.bf16.msra.mxu0 0
        %910 = vmatpush.bf16.msra.mxu0 0
        %911 = vmatpush.bf16.msra.mxu0 0
        %912 = vmatpush.bf16.msra.mxu0 0
        %913 = vmatpush.bf16.msra.mxu0 0
        %914 = vmatpush.bf16.msra.mxu0 0
        %915 = vmatpush.bf16.msra.mxu0 %v903
        %916 = vmatmul.bf16.gmra.mxu0 %v906
        %v917 = vpop.f32.mrf.mxu0
        %v918 = vadd.f32 0.0, %v917
        %v919 = vpop.f32.mrf.mxu0
        %v920 = vadd.f32 0.0, %v919
        %921 = vdwg.mxu0
        %v922 = vpack.c.bf16 %v920, %v918
        %v925 = vunpack.c.l.b16 %v648
        %v926 = vunpack.c.l.b16 %v649
        %v927 = vpack.c.b16 %v926, %v925
        %v930 = vsel %vm663, %v922, 0
        %932 = vmatpush.bf16.msra.mxu0 0
        %933 = vmatpush.bf16.msra.mxu0 0
        %934 = vmatpush.bf16.msra.mxu0 0
        %935 = vmatpush.bf16.msra.mxu0 0
        %936 = vmatpush.bf16.msra.mxu0 0
        %937 = vmatpush.bf16.msra.mxu0 0
        %938 = vmatpush.bf16.msra.mxu0 0
        %939 = vmatpush.bf16.msra.mxu0 %v927
        %940 = vmatmul.bf16.gmra.mxu0 %v930
        %v941 = vpop.f32.mrf.mxu0
        %v942 = vadd.f32 0.0, %v941
        %v943 = vpop.f32.mrf.mxu0
        %v944 = vadd.f32 0.0, %v943
        %945 = vdwg.mxu0
        %v946 = vadd.f32 %v851, %v942
        %v947 = vadd.f32 %v852, %v944
        %948 = vrot.lane.b32.xlu0 %v657, 80
        %v949 = vpop.permute.xlu0 %948
        %950 = vrot.lane.b32.xlu0 %v662, 80
        %v951 = vpop.permute.xlu0 %950
        %v953 = vsel %vm663, %v949, 0
        %v956 = vsel %vm663, %v951, 0
        %958 = vmatpush.bf16.xpose.msra.mxu0 0
        %959 = vmatpush.bf16.xpose.msra.mxu0 0
        %960 = vmatpush.bf16.xpose.msra.mxu0 0
        %961 = vmatpush.bf16.xpose.msra.mxu0 0
        %962 = vmatpush.bf16.xpose.msra.mxu0 0
        %963 = vmatpush.bf16.xpose.msra.mxu0 0
        %964 = vmatpush.bf16.xpose.msra.mxu0 0
        %965 = vmatpush.bf16.xpose.msra.mxu0 %v956
        %966 = vmatmul.bf16.gmra.mxu0 %v953
        %v967 = vpop.f32.mrf.mxu0
        %v968 = vadd.f32 0.0, %v967
        %v969 = vpop.f32.mrf.mxu0
        %v970 = vadd.f32 0.0, %v969
        %971 = vdwg.mxu0
        %v972 = vmul.f32 %v968, 0.25
        %v973 = vmul.f32 %v970, 0.25
        %v974 = vsel %vm663, %v972, -inf
        %975 = vmax.xlane.f32.xlu0 %v974
        %v976 = vpop.xlane.xlu0 %975
        %v977 = vsel %vm663, %v973, -inf
        %978 = vmax.xlane.f32.xlu0 %v977
        %v979 = vpop.xlane.xlu0 %978
        %v980 = vsub.f32 %v972, %v976
        %v981 = vsub.f32 %v973, %v979
        %v982 = vmul.f32 %v980, 1.442695
        %v983 = vpow.pop %v982
        %v984 = vmul.f32 %v981, 1.442695
        %v985 = vpow.pop %v984
        %v986 = vsel %vm663, %v983, 0.0
        %987 = vadd.xlane.f32.xlu0 %v986
        %v988 = vpop.xlane.xlu0 %987
        %v989 = vsel %vm663, %v985, 0.0
        %990 = vadd.xlane.f32.xlu0 %v989
        %v991 = vpop.xlane.xlu0 %990
        %v992 = vrcp.pop %v988
        %v993 = vrcp.pop %v991
        %v994 = vmul.f32 %v983, %v992
        %v995 = vmul.f32 %v985, %v993
        %v996 = vpack.c.bf16 %v995, %v994
        %997 = vrot.lane.b32.xlu0 %v662, 16
        %v998 = vpop.permute.xlu0 %997
        %v1001 = vsel %vm663, %v996, 0
        %1003 = vmatpush.bf16.msra.mxu0 0
        %1004 = vmatpush.bf16.msra.mxu0 0
        %1005 = vmatpush.bf16.msra.mxu0 0
        %1006 = vmatpush.bf16.msra.mxu0 0
        %1007 = vmatpush.bf16.msra.mxu0 0
        %1008 = vmatpush.bf16.msra.mxu0 0
        %1009 = vmatpush.bf16.msra.mxu0 0
        %1010 = vmatpush.bf16.msra.mxu0 %v998
        %1011 = vmatmul.bf16.gmra.mxu0 %v1001
        %v1012 = vpop.f32.mrf.mxu0
        %v1013 = vadd.f32 0.0, %v1012
        %v1014 = vpop.f32.mrf.mxu0
        %v1015 = vadd.f32 0.0, %v1014
        %1016 = vdwg.mxu0
        %v1017 = vpack.c.bf16 %v1015, %v1013
        %v1020 = vunpack.c.l.b16 %v650
        %v1021 = vunpack.c.l.b16 %v651
        %v1022 = vpack.c.b16 %v1021, %v1020
        %v1025 = vsel %vm663, %v1017, 0
        %1027 = vmatpush.bf16.msra.mxu0 0
        %1028 = vmatpush.bf16.msra.mxu0 0
        %1029 = vmatpush.bf16.msra.mxu0 0
        %1030 = vmatpush.bf16.msra.mxu0 0
        %1031 = vmatpush.bf16.msra.mxu0 0
        %1032 = vmatpush.bf16.msra.mxu0 0
        %1033 = vmatpush.bf16.msra.mxu0 0
        %1034 = vmatpush.bf16.msra.mxu0 %v1022
        %1035 = vmatmul.bf16.gmra.mxu0 %v1025
        %v1036 = vpop.f32.mrf.mxu0
        %v1037 = vadd.f32 0.0, %v1036
        %v1038 = vpop.f32.mrf.mxu0
        %v1039 = vadd.f32 0.0, %v1038
        %1040 = vdwg.mxu0
        %v1041 = vadd.f32 %v946, %v1037
        %v1042 = vadd.f32 %v947, %v1039
        %v1043 = vld [vmem:[#allocation7] sm:$0xf]
        %v1044 = vld [vmem:[#allocation7 + $0x4] sm:$0xf]
        %v1045 = vld [vmem:[#allocation7 + $0x8] sm:$0xf]
        %v1046 = vld [vmem:[#allocation7 + $0xc] sm:$0xf]
        %v1047 = vld [vmem:[#allocation7 + $0x10] sm:$0xf]
        %v1048 = vld [vmem:[#allocation7 + $0x14] sm:$0xf]
        %v1049 = vld [vmem:[#allocation7 + $0x18] sm:$0xf]
        %v1050 = vld [vmem:[#allocation7 + $0x1c] sm:$0xf]
        %v1051 = vpack.c.bf16 %v1042, %v1041
        %v1052 = vld [vmem:[#allocation8] sm:$0xf]
        %v1053 = vld [vmem:[#allocation8 + $0x4] sm:$0xf]
        %v1054 = vld [vmem:[#allocation8 + $0x8] sm:$0xf]
        %v1055 = vld [vmem:[#allocation8 + $0xc] sm:$0xf]
        %v1056 = vld [vmem:[#allocation8 + $0x10] sm:$0xf]
        %v1057 = vld [vmem:[#allocation8 + $0x14] sm:$0xf]
        %v1058 = vld [vmem:[#allocation8 + $0x18] sm:$0xf]
        %v1059 = vld [vmem:[#allocation8 + $0x1c] sm:$0xf]
        %v1068 = vunpack.c.l.b16 %v1052
        %v1069 = vunpack.c.l.b16 %v1053
        %v1070 = vunpack.c.l.b16 %v1054
        %v1071 = vunpack.c.l.b16 %v1055
        %v1072 = vunpack.c.l.b16 %v1056
        %v1073 = vunpack.c.l.b16 %v1057
        %v1074 = vunpack.c.l.b16 %v1058
        %v1075 = vunpack.c.l.b16 %v1059
        %v1076 = vpack.c.b16 %v1069, %v1068
        %v1077 = vpack.c.b16 %v1071, %v1070
        %v1078 = vpack.c.b16 %v1073, %v1072
        %v1079 = vpack.c.b16 %v1075, %v1074
        %v1085 = vsel %vm569, %v1051, 0
        %1087 = vmatpush.bf16.msra.mxu0 0
        %1088 = vmatpush.bf16.msra.mxu0 0
        %1089 = vmatpush.bf16.msra.mxu0 0
        %1090 = vmatpush.bf16.msra.mxu0 0
        %1091 = vmatpush.bf16.msra.mxu0 %v1079
        %1092 = vmatpush.bf16.msra.mxu0 %v1078
        %1093 = vmatpush.bf16.msra.mxu0 %v1077
        %1094 = vmatpush.bf16.msra.mxu0 %v1076
        %1095 = vmatmul.bf16.gmra.mxu0 %v1085
        %v1096 = vpop.f32.mrf.mxu0
        %v1097 = vadd.f32 0.0, %v1096
        %v1098 = vpop.f32.mrf.mxu0
        %v1099 = vadd.f32 0.0, %v1098
        %1100 = vdwg.mxu0
        %v1109 = vunpack.c.l.b16 %v1043
        %v1110 = vunpack.c.l.b16 %v1044
        %v1111 = vunpack.c.l.b16 %v1045
        %v1112 = vunpack.c.l.b16 %v1046
        %v1113 = vunpack.c.l.b16 %v1047
        %v1114 = vunpack.c.l.b16 %v1048
        %v1115 = vunpack.c.l.b16 %v1049
        %v1116 = vunpack.c.l.b16 %v1050
        %v1117 = vpack.c.b16 %v1110, %v1109
        %v1118 = vpack.c.b16 %v1112, %v1111
        %v1119 = vpack.c.b16 %v1114, %v1113
        %v1120 = vpack.c.b16 %v1116, %v1115
        %1125 = vmatpush.bf16.msra.mxu0 0
        %1126 = vmatpush.bf16.msra.mxu0 0
        %1127 = vmatpush.bf16.msra.mxu0 0
        %1128 = vmatpush.bf16.msra.mxu0 0
        %1129 = vmatpush.bf16.msra.mxu0 %v1120
        %1130 = vmatpush.bf16.msra.mxu0 %v1119
        %1131 = vmatpush.bf16.msra.mxu0 %v1118
        %1132 = vmatpush.bf16.msra.mxu0 %v1117
        %1133 = vmatmul.bf16.gmra.mxu0 %v571
        %v1134 = vpop.f32.mrf.mxu0
        %v1135 = vadd.f32 %v1097, %v1134
        %v1136 = vpop.f32.mrf.mxu0
        %v1137 = vadd.f32 %v1099, %v1136
        %1138 = vdwg.mxu0
        %v1139 = vld [vmem:[%s10] sm:$0x1]
        %v1141 = vperm.slane %v1139, 0
        %v1143 = vadd.f32 %v1135, %v1141
        %v1144 = vadd.f32 %v1137, %v1141
        %v1145 = vmax.f32 %v1143, 0.0
        %v1146 = vmax.f32 %v1144, 0.0
        %v1147 = vpack.c.bf16 %v1146, %v1145
        %v1148 = vld [vmem:[%s11] sm:$0xf]
        %v1149 = vld [vmem:[%s11 + $0x4] sm:$0xf]
        %v1150 = vld [vmem:[%s11 + $0x8] sm:$0xf]
        %v1151 = vld [vmem:[%s11 + $0xc] sm:$0xf]
        %v1152 = vld [vmem:[%s11 + $0x10] sm:$0xf]
        %v1153 = vld [vmem:[%s11 + $0x14] sm:$0xf]
        %v1154 = vld [vmem:[%s11 + $0x18] sm:$0xf]
        %v1155 = vld [vmem:[%s11 + $0x1c] sm:$0xf]
        %v1156 = vld [vmem:[%s11 + $0x20] sm:$0xf]
        %v1157 = vld [vmem:[%s11 + $0x24] sm:$0xf]
        %v1158 = vld [vmem:[%s11 + $0x28] sm:$0xf]
        %v1159 = vld [vmem:[%s11 + $0x2c] sm:$0xf]
        %v1160 = vld [vmem:[%s11 + $0x30] sm:$0xf]
        %v1161 = vld [vmem:[%s11 + $0x34] sm:$0xf]
        %v1162 = vld [vmem:[%s11 + $0x38] sm:$0xf]
        %v1163 = vld [vmem:[%s11 + $0x3c] sm:$0xf]
        %v1164 = vld [vmem:[%s12] sm:$0x1]
        %v1166 = vperm.slane %v1164, 0
        %v1184 = vunpack.c.l.b16 %v1148
        %v1185 = vunpack.c.l.b16 %v1149
        %v1186 = vunpack.c.l.b16 %v1150
        %v1187 = vunpack.c.l.b16 %v1151
        %v1188 = vunpack.c.l.b16 %v1152
        %v1189 = vunpack.c.l.b16 %v1153
        %v1190 = vunpack.c.l.b16 %v1154
        %v1191 = vunpack.c.l.b16 %v1155
        %v1192 = vunpack.c.l.b16 %v1156
        %v1193 = vunpack.c.l.b16 %v1157
        %v1194 = vunpack.c.l.b16 %v1158
        %v1195 = vunpack.c.l.b16 %v1159
        %v1196 = vunpack.c.l.b16 %v1160
        %v1197 = vunpack.c.l.b16 %v1161
        %v1198 = vunpack.c.l.b16 %v1162
        %v1199 = vunpack.c.l.b16 %v1163
        %v1200 = vpack.c.b16 %v1185, %v1184
        %v1201 = vpack.c.b16 %v1187, %v1186
        %v1202 = vpack.c.b16 %v1189, %v1188
        %v1203 = vpack.c.b16 %v1191, %v1190
        %v1204 = vpack.c.b16 %v1193, %v1192
        %v1205 = vpack.c.b16 %v1195, %v1194
        %v1206 = vpack.c.b16 %v1197, %v1196
        %v1207 = vpack.c.b16 %v1199, %v1198
        %1216 = vmatpush.bf16.msra.mxu0 %v1207
        %1217 = vmatpush.bf16.msra.mxu0 %v1206
        %1218 = vmatpush.bf16.msra.mxu0 %v1205
        %1219 = vmatpush.bf16.msra.mxu0 %v1204
        %1220 = vmatpush.bf16.msra.mxu0 %v1203
        %1221 = vmatpush.bf16.msra.mxu0 %v1202
        %1222 = vmatpush.bf16.msra.mxu0 %v1201
        %1223 = vmatpush.bf16.msra.mxu0 %v1200
        %1224 = vmatmul.bf16.gmra.mxu0 %v1147
        %v1225 = vpop.f32.mrf.mxu0
        %v1226 = vadd.f32 %v1166, %v1225
        %v1227 = vpop.f32.mrf.mxu0
        %v1228 = vadd.f32 %v1166, %v1227
        %1229 = vdwg.mxu0
        %v1230 = vadd.f32 %v527, %v1226
        %v1231 = vadd.f32 %v528, %v1228
        %1232 = vst.msk [vmem:[%s515] sm:$0xff] %vm569, %v1230
        %1233 = vst.msk [vmem:[%s515 + $0x8] sm:$0xff] %vm569, %v1231
        %s1234 = sand.u32 %s321, 1
        %s1235 = scalar_lea.sflag [#allocation4], %s1234
        %s1236 = sand.u32 %s321, 1
        %s1237 = smul.addr %s1236, 16
        %s1238 = scalar_lea.vmem [#allocation10], %s1237
        // Predicated region
        $region89: #{tpu_custom_call.1} parent=71 // pred_check
          %p1239 = pneg %p331
        $region90: #{tpu_custom_call.1} parent=71 // pred_check_branch
          %1241 = sbr.rel (%p1239) target = $region92
        $region91: #{tpu_custom_call.1} parent=71 // pred_region
          %1243 = vsyncadd %s1235, 0
          %s1244 = smul.addr %s30, 2
          %s1245 = smul.addr %s1244, 8
          %s1246 = scalar_lea.hbm %s13, %s1245
          %s1247 = sshll.u32 %s1238, 4
          %s1248 = int_to_ptr.vmem [resolvable:$true] %s1247
          %s1249 = sshll.u32 %s1246, 4
          %s1250 = int_to_ptr.hbm [resolvable:$true] %s1249
          %1255 = dma.vmem_to_hbm [thread:$0]  %s1248, 256, %s1250, %s1235, 128, 128, 8
        $region92: #{tpu_custom_call.1} parent=71 // pred_fallthru
          _
      $region72: #{tpu_custom_call.1} parent=5 // pred_fallthru
        _
      %p1256 = scmp.le.s32.totalorder 2, %s25
      // Predicated region
      $region93: #{tpu_custom_call.1} parent=5 // pred_check
        %p1257 = pneg %p1256
      $region94: #{tpu_custom_call.1} parent=5 // pred_check_branch
        %1259 = sbr.rel (%p1257) target = $region96
      $region95: #{tpu_custom_call.1} parent=5 // pred_region
        %s1260 = ssub.s32 %s25, 2
        // Predicated region
        $region97: #{tpu_custom_call.1} parent=95 // pred_check
          %p1261 = pneg %p337
        $region98: #{tpu_custom_call.1} parent=95 // pred_check_branch
          %1263 = sbr.rel (%p1261) target = $region100
        $region99: #{tpu_custom_call.1} parent=95 // pred_region
          %s1264 = sand.u32 %s322, 1
          %s1265 = scalar_lea.sflag [#allocation4], %s1264
          %s1266 = sand.u32 %s322, 1
          %s1267 = smul.addr %s1266, 16
          %s1268 = scalar_lea.vmem [#allocation10], %s1267
          %1270 = dma.done %s1265, 256
        $region100: #{tpu_custom_call.1} parent=95 // pred_fallthru
          _
      $region96: #{tpu_custom_call.1} parent=5 // pred_fallthru
        _
    $region6: #{tpu_custom_call.1} parent=1 // loop_footer
      %s29 = sadd.s32 1, %s25
    $region7: #{tpu_custom_call.1} parent=1 // loop_footer_branch
      %24 = sbr.rel target = $region3
    $region8: #{tpu_custom_call.1} parent=1 // loop_exit
      _
    %1271 = vsyncpa [#allocation3], 1
    %s1272 = scalar_lea.sflag [#allocation3], 1
    %1273 = vsyncpa %s1272, 1
    %1274 = vsyncpa [#allocation6], 1
    %1275 = vsyncpa [#allocation9], 1
    %1276 = vsyncpa [#allocation4], 1
    %s1277 = scalar_lea.sflag [#allocation4], 1
    %1278 = vsyncpa %s1277, 1

</llo_original>
